<compile_context>
chip_gen: v7x
topology: tpu7x:2x2x1
jax: 0.10.0
libtpu: 0.0.40
codegen_flags: <defaults>
</compile_context>

<pallas_src>
import functools

import jax
import jax.numpy as jnp
import numpy as np
from jax.experimental import pallas as pl
from jax.experimental.pallas import tpu as pltpu

LATENT = 50    # p_dims[0] == q_dims[-1]
HIDDEN = 100   # q_dims[1] == p_dims[1]
HID_PAD = 128  # HIDDEN padded to one vreg lane width
Q1_PAD = 128   # combined mu|logvar lanes
LV_OFF = 64    # logvar starts at lane 64


# ---------------------------------------------------------------------------
# Tiling plan
# ---------------------------------------------------------------------------

def _round_up(n, m):
    return ((n + m - 1) // m) * m


def _vmem_capacity_bytes():
    try:
        return int(pltpu.get_tpu_info().vmem_capacity_bytes)
    except Exception:
        return 64 * 1024 * 1024   # conservative (v7x per-TC)


def _pick_tile(dim, cap, lo=512):
    """Pick a 128-multiple tile <= cap minimizing padding of `dim`."""
    dim128 = _round_up(dim, 128)
    if dim128 <= cap:
        return dim128, dim128
    best_t, best_pad = None, None
    for t in range(lo, cap + 1, 128):
        pad = _round_up(dim, t)
        if best_pad is None or pad < best_pad or (pad == best_pad and t > best_t):
            best_t, best_pad = t, pad
    return best_t, best_pad


def make_plan(batch, in_dims, item_num):
    cap = _vmem_capacity_bytes()
    big_vmem = cap >= 96 * 1024 * 1024      # v5e / v6e (128 MiB); v7x has 64 MiB

    # Batch tile: multiple of 16 (bf16 sublane packing); 512 on 128-MiB parts.
    if batch >= 512 and big_vmem:
        tb = 512
    elif batch >= 256:
        tb = 256
    else:
        tb = _round_up(max(batch, 16), 16)
    b_pad = _round_up(batch, tb)

    # Encoder K strip over in_dims (keeps the f32 x temp to a few vregs).
    tk, in_pad = _pick_tile(in_dims, 1024)

    # Decoder item tile: big to amortize the ~0.35us per-step overhead.
    tn, item_pad = _pick_tile(item_num, 2048 if big_vmem else 1024)

    return dict(batch=batch, in_dims=in_dims, item_num=item_num,
                tb=tb, b_pad=b_pad, tk=tk, in_pad=in_pad,
                tn=tn, item_pad=item_pad,
                vmem_limit=32 * 1024 * 1024)


# ---------------------------------------------------------------------------
# One-time weight preparation (pad + cast, hoisted out of the per-call path)
# ---------------------------------------------------------------------------

def prepare_params(params, plan):
    """Pad / cast weights into kernel layout once; reuse across forward calls."""
    in_pad, item_pad = plan["in_pad"], plan["item_pad"]

    def pad2(a, rows, cols, dtype):
        a = np.asarray(a, np.float32)
        out = np.zeros((rows, cols), np.float32)
        out[:a.shape[0], :a.shape[1]] = a
        return jnp.asarray(out, dtype)

    wq1 = np.asarray(params["wq1"], np.float32)              # (HIDDEN, 2*LATENT)
    bq1 = np.asarray(params["bq1"], np.float32).reshape(1, -1)

    # Lane-dense q1: mu -> lanes [0,64), logvar -> lanes [64,128).
    wq1c = np.zeros((HID_PAD, Q1_PAD), np.float32)
    wq1c[:HIDDEN, :LATENT] = wq1[:, :LATENT]
    wq1c[:HIDDEN, LV_OFF:LV_OFF + LATENT] = wq1[:, LATENT:]
    bq1c = np.zeros((1, Q1_PAD), np.float32)
    bq1c[:, :LATENT] = bq1[:, :LATENT]
    bq1c[:, LV_OFF:LV_OFF + LATENT] = bq1[:, LATENT:]

    # wp0 consumes the full (TB, 128) mu|logvar block; rows [LATENT,128) are
    # zero so only the mu lanes contribute (z == mu in eval mode).
    wp0c = np.zeros((Q1_PAD, HID_PAD), np.float32)
    wp0c[:LATENT, :HIDDEN] = np.asarray(params["wp0"], np.float32)

    return dict(
        wq0=pad2(params["wq0"], in_pad, HID_PAD, jnp.bfloat16),
        bq0=pad2(params["bq0"], 1, HID_PAD, jnp.float32),
        wq1=jnp.asarray(wq1c, jnp.bfloat16),
        bq1=jnp.asarray(bq1c, jnp.float32),
        wp0=jnp.asarray(wp0c, jnp.bfloat16),
        bp0=pad2(params["bp0"], 1, HID_PAD, jnp.float32),
        wp1=pad2(params["wp1"], HID_PAD, item_pad, jnp.bfloat16),
        bp1=pad2(params["bp1"], 1, item_pad, jnp.float32),
    )


# ---------------------------------------------------------------------------
# Kernels
# ---------------------------------------------------------------------------

def _encoder_kernel(x_ref, wq0_ref, bq0_ref, wq1_ref, bq1_ref, wp0_ref, bp0_ref,
                    mulv_ref, h2_ref, acc_ref, ss_ref):
    """normalize + q0(tanh) + q1 + p0(tanh); K-tiled over in_dims strips."""
    k = pl.program_id(1)

    @pl.when(k == 0)
    def _init():
        acc_ref[...] = jnp.zeros_like(acc_ref)
        ss_ref[...] = jnp.zeros_like(ss_ref)

    x = x_ref[...]                                             # (TB, TK) bf16
    xf = x.astype(jnp.float32)
    ss_ref[...] += jnp.sum(xf * xf, axis=1, keepdims=True)     # partial ||x||^2
    acc_ref[...] += jnp.dot(x, wq0_ref[...],
                            preferred_element_type=jnp.float32)

    @pl.when(k == pl.num_programs(1) - 1)
    def _finalize():
        # 1/max(||x||,1e-12) == rsqrt(max(ss,1e-24)); row scaling commutes with
        # the linear layer, so it is applied to the accumulated x @ wq0.
        inv = jax.lax.rsqrt(jnp.maximum(ss_ref[...], 1e-24))
        h1 = jnp.tanh(acc_ref[...] * inv + bq0_ref[...]).astype(jnp.bfloat16)

        # q_layers[1]: single lane-dense matmul; mu|logvar in one 128-lane block
        mulv = (jnp.dot(h1, wq1_ref[...], preferred_element_type=jnp.float32)
                + bq1_ref[...])
        mulv_ref[...] = mulv

        # reparameterize (eval): z = mu; p_layers[0]
        z = mulv.astype(jnp.bfloat16)            # logvar lanes killed by wp0 zeros
        h2 = jnp.tanh(jnp.dot(z, wp0_ref[...],
                              preferred_element_type=jnp.float32)
                      + bp0_ref[...])
        h2_ref[...] = h2.astype(jnp.bfloat16)


def _decoder_kernel(h2_ref, wp1_ref, bp1_ref, pred_ref):
    """p_layers[1]: decoder logits for one (batch tile, item tile)."""
    pred_ref[...] = (
        jnp.dot(h2_ref[...], wp1_ref[...], preferred_element_type=jnp.float32)
        + bp1_ref[...]).astype(jnp.bfloat16)


# ---------------------------------------------------------------------------
# pallas_call wrappers
# ---------------------------------------------------------------------------

def _encoder_call(xp, pp, plan):
    tb, tk = plan["tb"], plan["tk"]
    b_pad, in_pad = plan["b_pad"], plan["in_pad"]
    nb, nk = b_pad // tb, in_pad // tk

    const = lambda i, k: (0, 0)

    grid_spec = pltpu.PrefetchScalarGridSpec(
        num_scalar_prefetch=0,
        grid=(nb, nk),
        in_specs=[
            pl.BlockSpec((tb, tk), lambda i, k: (i, k)),       # x strip
            pl.BlockSpec((tk, HID_PAD), lambda i, k: (k, 0)),  # wq0 strip
            pl.BlockSpec((1, HID_PAD), const),                 # bq0
            pl.BlockSpec((HID_PAD, Q1_PAD), const),            # wq1 (mu|logvar)
            pl.BlockSpec((1, Q1_PAD), const),                  # bq1
            pl.BlockSpec((Q1_PAD, HID_PAD), const),            # wp0 (mu rows only)
            pl.BlockSpec((1, HID_PAD), const),                 # bp0
        ],
        out_specs=(
            pl.BlockSpec((tb, Q1_PAD), lambda i, k: (i, 0)),   # mu|logvar (f32)
            pl.BlockSpec((tb, HID_PAD), lambda i, k: (i, 0)),  # h2 (bf16)
        ),
        scratch_shapes=[pltpu.VMEM((tb, HID_PAD), jnp.float32),  # x@wq0 acc
                        pltpu.VMEM((tb, 1), jnp.float32)],       # sum(x^2)
    )

    out_shapes = (
        jax.ShapeDtypeStruct((b_pad, Q1_PAD), jnp.float32),
        jax.ShapeDtypeStruct((b_pad, HID_PAD), jnp.bfloat16),
    )

    flops = (2 * b_pad * in_pad * HID_PAD            # x @ wq0
             + 2 * b_pad * HID_PAD * Q1_PAD          # q1
             + 2 * b_pad * Q1_PAD * HID_PAD          # p0
             + 2 * b_pad * in_pad)                   # sum of squares
    transcendentals = 2 * b_pad * HID_PAD + b_pad    # two tanh layers + rsqrt
    bytes_accessed = (b_pad * in_pad * 2                       # x (bf16)
                      + nb * in_pad * HID_PAD * 2              # wq0 per batch tile
                      + (HID_PAD * Q1_PAD + Q1_PAD * HID_PAD) * 2
                      + (3 * HID_PAD + Q1_PAD) * 4             # biases
                      + b_pad * Q1_PAD * 4 + b_pad * HID_PAD * 2)

    return pl.pallas_call(
        _encoder_kernel,
        out_shape=out_shapes,
        grid_spec=grid_spec,
        compiler_params=pltpu.CompilerParams(
            dimension_semantics=("parallel", "arbitrary"),
            vmem_limit_bytes=plan["vmem_limit"]),
        cost_estimate=pl.CostEstimate(flops=int(flops),
                                      transcendentals=int(transcendentals),
                                      bytes_accessed=int(bytes_accessed)),
    )(xp, pp["wq0"], pp["bq0"], pp["wq1"], pp["bq1"], pp["wp0"], pp["bp0"])


def _decoder_call(h2, pp, plan):
    tb, tn = plan["tb"], plan["tn"]
    b_pad, item_pad = plan["b_pad"], plan["item_pad"]
    nb, nj = b_pad // tb, item_pad // tn

    grid_spec = pltpu.PrefetchScalarGridSpec(
        num_scalar_prefetch=0,
        grid=(nb, nj),
        in_specs=[
            pl.BlockSpec((tb, HID_PAD), lambda i, j: (i, 0)),  # h2 (resident per i)
            pl.BlockSpec((HID_PAD, tn), lambda i, j: (0, j)),  # wp1 item tile
            pl.BlockSpec((1, tn), lambda i, j: (0, j)),        # bp1 item tile
        ],
        out_specs=pl.BlockSpec((tb, tn), lambda i, j: (i, j)), # pred (bf16)
    )

    flops = 2 * b_pad * HID_PAD * item_pad
    bytes_accessed = (b_pad * HID_PAD * 2
                      + nb * (HID_PAD * item_pad * 2 + item_pad * 4)
                      + b_pad * item_pad * 2)

    return pl.pallas_call(
        _decoder_kernel,
        out_shape=jax.ShapeDtypeStruct((b_pad, item_pad), jnp.bfloat16),
        grid_spec=grid_spec,
        compiler_params=pltpu.CompilerParams(
            # both axes independent -> either can be sharded across v7x's 2 TCs
            dimension_semantics=("parallel", "parallel"),
            vmem_limit_bytes=plan["vmem_limit"]),
        cost_estimate=pl.CostEstimate(flops=int(flops),
                                      transcendentals=0,
                                      bytes_accessed=int(bytes_accessed)),
    )(h2, pp["wp1"], pp["bp1"])


def vae_forward(x, prepped, *, plan):
    """x: (B, in_dims) float32; prepped: output of prepare_params(plan)."""
    b, in_dims = plan["batch"], plan["in_dims"]
    assert x.shape == (b, in_dims)

    # Only x is padded / cast per call (weights already prepared).
    xp = jnp.pad(x.astype(jnp.bfloat16),
                 ((0, plan["b_pad"] - b), (0, plan["in_pad"] - in_dims)))

    mulv, h2 = _encoder_call(xp, prepped, plan)
    pred = _decoder_call(h2, prepped, plan)

    mu = mulv[:b, :LATENT]
    logvar = mulv[:b, LV_OFF:LV_OFF + LATENT]
    return pred[:b, :plan["item_num"]], mu, logvar


# ---------------------------------------------------------------------------
# Deterministic init matching the module's _init_weights distributions
# (weights stored as (fan_in, fan_out) so the kernel computes x @ W + b).
# ---------------------------------------------------------------------------

def init_params(key, in_dims, item_num):
    def linear(key, fan_in, fan_out):
        kw, kb = jax.random.split(key)
        std = np.sqrt(2.0 / (fan_in + fan_out))
        w = std * jax.random.normal(kw, (fan_in, fan_out), jnp.float32)
        b = 0.001 * jax.random.normal(kb, (1, fan_out), jnp.float32)
        return w, b

    keys = jax.random.split(key, 4)
    wq0, bq0 = linear(keys[0], in_dims, HIDDEN)        # q_layers[0]
    wq1, bq1 = linear(keys[1], HIDDEN, 2 * LATENT)     # q_layers[1]
    wp0, bp0 = linear(keys[2], LATENT, HIDDEN)         # p_layers[0]
    wp1, bp1 = linear(keys[3], HIDDEN, item_num)       # p_layers[1]
    return dict(wq0=wq0, bq0=bq0, wq1=wq1, bq1=bq1,
                wp0=wp0, bp0=bp0, wp1=wp1, bp1=bp1)


def vae_forward_ref(x, p):
    """Pure-JAX reference mirroring the kernel's bf16/f32 numerics."""
    xb = x.astype(jnp.bfloat16)
    xf = xb.astype(jnp.float32)
    inv = jax.lax.rsqrt(jnp.maximum(jnp.sum(xf * xf, axis=1, keepdims=True),
                                    1e-24))
    a0 = jnp.dot(xb, p["wq0"].astype(jnp.bfloat16),
                 preferred_element_type=jnp.float32)
    h1 = jnp.tanh(a0 * inv + p["bq0"]).astype(jnp.bfloat16)
    mu = (jnp.dot(h1, p["wq1"][:, :LATENT].astype(jnp.bfloat16),
                  preferred_element_type=jnp.float32) + p["bq1"][:, :LATENT])
    lv = (jnp.dot(h1, p["wq1"][:, LATENT:].astype(jnp.bfloat16),
                  preferred_element_type=jnp.float32) + p["bq1"][:, LATENT:])
    z = mu.astype(jnp.bfloat16)
    h2 = jnp.tanh(jnp.dot(z, p["wp0"].astype(jnp.bfloat16),
                          preferred_element_type=jnp.float32)
                  + p["bp0"]).astype(jnp.bfloat16)
    pred = (jnp.dot(h2, p["wp1"].astype(jnp.bfloat16),
                    preferred_element_type=jnp.float32) + p["bp1"])
    return pred, mu, lv


if __name__ == "__main__":
    key = jax.random.PRNGKey(0)
    k_x, k_p = jax.random.split(key)

    # Small shapes chosen so both the encoder K axis and the decoder item axis
    # have multiple tiles (in_pad > tk, item_pad > tn on any generation).
    B, IN_DIMS, ITEM_NUM = 32, 1500, 2500
    x = jax.random.uniform(k_x, (B, IN_DIMS), jnp.float32)
    params = init_params(k_p, IN_DIMS, ITEM_NUM)

    plan = make_plan(B, IN_DIMS, ITEM_NUM)
    prepped = prepare_params(params, plan)          # one-time pad/cast
    fwd = jax.jit(functools.partial(vae_forward, plan=plan))

    pred, mu, logvar = jax.block_until_ready(fwd(x, prepped))

    pred_r, mu_r, logvar_r = vae_forward_ref(x, params)
    np.testing.assert_allclose(np.asarray(pred, dtype=np.float32),
                               np.asarray(pred_r.astype(jnp.bfloat16),
                                          dtype=np.float32),
                               rtol=2e-2, atol=2e-2)
    np.testing.assert_allclose(np.asarray(mu), np.asarray(mu_r),
                               rtol=2e-3, atol=2e-3)
    np.testing.assert_allclose(np.asarray(logvar), np.asarray(logvar_r),
                               rtol=2e-3, atol=2e-3)

    print("KERNEL_OK")
</pallas_src>

<mosaic_0001>
module attributes {stable_mosaic.version = 11 : i64} {
  func.func @_encoder_kernel(%arg0: i32, %arg1: i32, %arg2: memref<32x768xbf16, #tpu.memory_space<vmem>>, %arg3: memref<768x128xbf16, #tpu.memory_space<vmem>>, %arg4: memref<1x128xf32, #tpu.memory_space<vmem>>, %arg5: memref<128x128xbf16, #tpu.memory_space<vmem>>, %arg6: memref<1x128xf32, #tpu.memory_space<vmem>>, %arg7: memref<128x128xbf16, #tpu.memory_space<vmem>>, %arg8: memref<1x128xf32, #tpu.memory_space<vmem>>, %arg9: memref<32x128xf32, #tpu.memory_space<vmem>>, %arg10: memref<32x128xbf16, #tpu.memory_space<vmem>>, %arg11: memref<32x128xf32, #tpu.memory_space<vmem>>, %arg12: memref<32x1xf32, #tpu.memory_space<vmem>>) attributes {dimension_semantics = [#tpu.dimension_semantics<parallel>, #tpu.dimension_semantics<arbitrary>], iteration_bounds = array<i64: 1, 2>, scalar_prefetch = 0 : i64, scratch_operands = 2 : i64, tpu.core_type = #tpu.core_type<tc>, window_params = [{transform_indices = @transform_0, window_bounds = array<i64: 32, 768>}, {transform_indices = @transform_1, window_bounds = array<i64: 768, 128>}, {pipeline_mode = #tpu.pipeline_mode<synchronous>, transform_indices = @transform_2, window_bounds = array<i64: 1, 128>}, {pipeline_mode = #tpu.pipeline_mode<synchronous>, transform_indices = @transform_3, window_bounds = array<i64: 128, 128>}, {pipeline_mode = #tpu.pipeline_mode<synchronous>, transform_indices = @transform_4, window_bounds = array<i64: 1, 128>}, {pipeline_mode = #tpu.pipeline_mode<synchronous>, transform_indices = @transform_5, window_bounds = array<i64: 128, 128>}, {pipeline_mode = #tpu.pipeline_mode<synchronous>, transform_indices = @transform_6, window_bounds = array<i64: 1, 128>}, {transform_indices = @transform_7, window_bounds = array<i64: 32, 128>}, {transform_indices = @transform_8, window_bounds = array<i64: 32, 128>}]} {
    %c0_i32 = arith.constant 0 : i32
    %0 = arith.cmpi eq, %arg1, %c0_i32 : i32
    %1 = arith.extui %0 : i1 to i32
    %c0_i32_0 = arith.constant 0 : i32
    %2 = arith.cmpi ne, %1, %c0_i32_0 : i32
    scf.if %2 {
      %cst_14 = arith.constant 0.000000e+00 : f32
      %19 = vector.broadcast %cst_14 : f32 to vector<32x128xf32>
      %c0_15 = arith.constant 0 : index
      %c0_16 = arith.constant 0 : index
      %20 = vector.load %arg11[%c0_15, %c0_16] : memref<32x128xf32, #tpu.memory_space<vmem>>, vector<32x128xf32>
      tpu.vector_store %arg11[%c0_15, %c0_16], %19 {strides = array<i32>} : memref<32x128xf32, #tpu.memory_space<vmem>>, vector<32x128xf32>,
      %cst_17 = arith.constant 0.000000e+00 : f32
      %21 = vector.broadcast %cst_17 : f32 to vector<32x1xf32>
      %c0_18 = arith.constant 0 : index
      %c0_19 = arith.constant 0 : index
      %22 = vector.load %arg12[%c0_18, %c0_19] : memref<32x1xf32, #tpu.memory_space<vmem>>, vector<32x1xf32>
      tpu.vector_store %arg12[%c0_18, %c0_19], %21 {strides = array<i32>} : memref<32x1xf32, #tpu.memory_space<vmem>>, vector<32x1xf32>,
    } else {
    }
    %c0 = arith.constant 0 : index
    %c0_1 = arith.constant 0 : index
    %3 = vector.load %arg2[%c0, %c0_1] : memref<32x768xbf16, #tpu.memory_space<vmem>>, vector<32x768xbf16>
    %4 = arith.extf %3 : vector<32x768xbf16> to vector<32x768xf32>
    %c0_2 = arith.constant 0 : index
    %c0_3 = arith.constant 0 : index
    %5 = vector.load %arg12[%c0_2, %c0_3] : memref<32x1xf32, #tpu.memory_space<vmem>>, vector<32x1xf32>
    %6 = arith.mulf %4, %4 : vector<32x768xf32>
    %cst = arith.constant dense<0.000000e+00> : vector<32xf32>
    %7 = vector.multi_reduction <add>, %6, %cst [1] : vector<32x768xf32> to vector<32xf32>
    %8 = vector.shape_cast %7 : vector<32xf32> to vector<32x1xf32>
    %9 = arith.addf %5, %8 : vector<32x1xf32>
    %c0_4 = arith.constant 0 : index
    %c0_5 = arith.constant 0 : index
    %10 = vector.load %arg12[%c0_4, %c0_5] : memref<32x1xf32, #tpu.memory_space<vmem>>, vector<32x1xf32>
    tpu.vector_store %arg12[%c0_4, %c0_5], %9 {strides = array<i32>} : memref<32x1xf32, #tpu.memory_space<vmem>>, vector<32x1xf32>,
    %c0_6 = arith.constant 0 : index
    %c0_7 = arith.constant 0 : index
    %11 = vector.load %arg11[%c0_6, %c0_7] : memref<32x128xf32, #tpu.memory_space<vmem>>, vector<32x128xf32>
    %c0_8 = arith.constant 0 : index
    %c0_9 = arith.constant 0 : index
    %12 = vector.load %arg3[%c0_8, %c0_9] : memref<768x128xbf16, #tpu.memory_space<vmem>>, vector<768x128xbf16>
    %cst_10 = arith.constant dense<0.000000e+00> : vector<32x128xf32>
    %13 = tpu.matmul %3, %12, %cst_10 {dimension_numbers = #tpu.dot_dimension_numbers<[1], [0], [0], [1], [0, 0, 1, 1], [], []>} : vector<32x768xbf16>, vector<768x128xbf16>, vector<32x128xf32> -> vector<32x128xf32>
    %14 = arith.addf %11, %13 : vector<32x128xf32>
    %c0_11 = arith.constant 0 : index
    %c0_12 = arith.constant 0 : index
    %15 = vector.load %arg11[%c0_11, %c0_12] : memref<32x128xf32, #tpu.memory_space<vmem>>, vector<32x128xf32>
    tpu.vector_store %arg11[%c0_11, %c0_12], %14 {strides = array<i32>} : memref<32x128xf32, #tpu.memory_space<vmem>>, vector<32x128xf32>,
    %c1_i32 = arith.constant 1 : i32
    %16 = arith.cmpi eq, %arg1, %c1_i32 : i32
    %17 = arith.extui %16 : i1 to i32
    %c0_i32_13 = arith.constant 0 : i32
    %18 = arith.cmpi ne, %17, %c0_i32_13 : i32
    scf.if %18 {
      %c0_14 = arith.constant 0 : index
      %c0_15 = arith.constant 0 : index
      %19 = vector.load %arg12[%c0_14, %c0_15] : memref<32x1xf32, #tpu.memory_space<vmem>>, vector<32x1xf32>
      %cst_16 = arith.constant 1.000000e-24 : f32
      %20 = vector.broadcast %cst_16 : f32 to vector<32x1xf32>
      %21 = arith.maximumf %19, %20 : vector<32x1xf32>
      %22 = math.rsqrt %21 : vector<32x1xf32>
      %c0_17 = arith.constant 0 : index
      %c0_18 = arith.constant 0 : index
      %23 = vector.load %arg11[%c0_17, %c0_18] : memref<32x128xf32, #tpu.memory_space<vmem>>, vector<32x128xf32>
      %24 = vector.broadcast %22 : vector<32x1xf32> to vector<32x128xf32>
      %25 = arith.mulf %23, %24 : vector<32x128xf32>
      %c0_19 = arith.constant 0 : index
      %c0_20 = arith.constant 0 : index
      %26 = vector.load %arg4[%c0_19, %c0_20] : memref<1x128xf32, #tpu.memory_space<vmem>>, vector<1x128xf32>
      %27 = vector.broadcast %26 : vector<1x128xf32> to vector<32x128xf32>
      %28 = arith.addf %25, %27 : vector<32x128xf32>
      %29 = math.tanh %28 : vector<32x128xf32>
      %30 = arith.truncf %29 : vector<32x128xf32> to vector<32x128xbf16>
      %c0_21 = arith.constant 0 : index
      %c0_22 = arith.constant 0 : index
      %31 = vector.load %arg5[%c0_21, %c0_22] : memref<128x128xbf16, #tpu.memory_space<vmem>>, vector<128x128xbf16>
      %cst_23 = arith.constant dense<0.000000e+00> : vector<32x128xf32>
      %32 = tpu.matmul %30, %31, %cst_23 {dimension_numbers = #tpu.dot_dimension_numbers<[1], [0], [0], [1], [0, 0, 1, 1], [], []>} : vector<32x128xbf16>, vector<128x128xbf16>, vector<32x128xf32> -> vector<32x128xf32>
      %c0_24 = arith.constant 0 : index
      %c0_25 = arith.constant 0 : index
      %33 = vector.load %arg6[%c0_24, %c0_25] : memref<1x128xf32, #tpu.memory_space<vmem>>, vector<1x128xf32>
      %34 = vector.broadcast %33 : vector<1x128xf32> to vector<32x128xf32>
      %35 = arith.addf %32, %34 : vector<32x128xf32>
      %c0_26 = arith.constant 0 : index
      %c0_27 = arith.constant 0 : index
      %36 = vector.load %arg9[%c0_26, %c0_27] : memref<32x128xf32, #tpu.memory_space<vmem>>, vector<32x128xf32>
      tpu.vector_store %arg9[%c0_26, %c0_27], %35 {strides = array<i32>} : memref<32x128xf32, #tpu.memory_space<vmem>>, vector<32x128xf32>,
      %37 = arith.truncf %35 : vector<32x128xf32> to vector<32x128xbf16>
      %c0_28 = arith.constant 0 : index
      %c0_29 = arith.constant 0 : index
      %38 = vector.load %arg7[%c0_28, %c0_29] : memref<128x128xbf16, #tpu.memory_space<vmem>>, vector<128x128xbf16>
      %cst_30 = arith.constant dense<0.000000e+00> : vector<32x128xf32>
      %39 = tpu.matmul %37, %38, %cst_30 {dimension_numbers = #tpu.dot_dimension_numbers<[1], [0], [0], [1], [0, 0, 1, 1], [], []>} : vector<32x128xbf16>, vector<128x128xbf16>, vector<32x128xf32> -> vector<32x128xf32>
      %c0_31 = arith.constant 0 : index
      %c0_32 = arith.constant 0 : index
      %40 = vector.load %arg8[%c0_31, %c0_32] : memref<1x128xf32, #tpu.memory_space<vmem>>, vector<1x128xf32>
      %41 = vector.broadcast %40 : vector<1x128xf32> to vector<32x128xf32>
      %42 = arith.addf %39, %41 : vector<32x128xf32>
      %43 = math.tanh %42 : vector<32x128xf32>
      %44 = arith.truncf %43 : vector<32x128xf32> to vector<32x128xbf16>
      %c0_33 = arith.constant 0 : index
      %c0_34 = arith.constant 0 : index
      %45 = vector.load %arg10[%c0_33, %c0_34] : memref<32x128xbf16, #tpu.memory_space<vmem>>, vector<32x128xbf16>
      tpu.vector_store %arg10[%c0_33, %c0_34], %44 {strides = array<i32>} : memref<32x128xbf16, #tpu.memory_space<vmem>>, vector<32x128xbf16>,
    } else {
    }
    return
  }
  func.func @transform_0(%arg0: i32, %arg1: i32) -> (i32, i32) {
    %c0_i32 = arith.constant 0 : i32
    return %arg0, %arg1 : i32, i32
  }
  func.func @transform_1(%arg0: i32, %arg1: i32) -> (i32, i32) {
    %c0_i32 = arith.constant 0 : i32
    %c0_i32_0 = arith.constant 0 : i32
    return %arg1, %c0_i32 : i32, i32
  }
  func.func @transform_2(%arg0: i32, %arg1: i32) -> (i32, i32) {
    %c0_i32 = arith.constant 0 : i32
    %c0_i32_0 = arith.constant 0 : i32
    %c0_i32_1 = arith.constant 0 : i32
    return %c0_i32, %c0_i32_0 : i32, i32
  }
  func.func @transform_3(%arg0: i32, %arg1: i32) -> (i32, i32) {
    %c0_i32 = arith.constant 0 : i32
    %c0_i32_0 = arith.constant 0 : i32
    %c0_i32_1 = arith.constant 0 : i32
    return %c0_i32, %c0_i32_0 : i32, i32
  }
  func.func @transform_4(%arg0: i32, %arg1: i32) -> (i32, i32) {
    %c0_i32 = arith.constant 0 : i32
    %c0_i32_0 = arith.constant 0 : i32
    %c0_i32_1 = arith.constant 0 : i32
    return %c0_i32, %c0_i32_0 : i32, i32
  }
  func.func @transform_5(%arg0: i32, %arg1: i32) -> (i32, i32) {
    %c0_i32 = arith.constant 0 : i32
    %c0_i32_0 = arith.constant 0 : i32
    %c0_i32_1 = arith.constant 0 : i32
    return %c0_i32, %c0_i32_0 : i32, i32
  }
  func.func @transform_6(%arg0: i32, %arg1: i32) -> (i32, i32) {
    %c0_i32 = arith.constant 0 : i32
    %c0_i32_0 = arith.constant 0 : i32
    %c0_i32_1 = arith.constant 0 : i32
    return %c0_i32, %c0_i32_0 : i32, i32
  }
  func.func @transform_7(%arg0: i32, %arg1: i32) -> (i32, i32) {
    %c0_i32 = arith.constant 0 : i32
    %c0_i32_0 = arith.constant 0 : i32
    return %arg0, %c0_i32 : i32, i32
  }
  func.func @transform_8(%arg0: i32, %arg1: i32) -> (i32, i32) {
    %c0_i32 = arith.constant 0 : i32
    %c0_i32_0 = arith.constant 0 : i32
    return %arg0, %c0_i32 : i32, i32
  }
}

module attributes {stable_mosaic.version = 11 : i64} {
  func.func @_decoder_kernel(%arg0: i32, %arg1: i32, %arg2: memref<32x128xbf16, #tpu.memory_space<vmem>>, %arg3: memref<128x640xbf16, #tpu.memory_space<vmem>>, %arg4: memref<1x640xf32, #tpu.memory_space<vmem>>, %arg5: memref<32x640xbf16, #tpu.memory_space<vmem>>) attributes {dimension_semantics = [#tpu.dimension_semantics<parallel>, #tpu.dimension_semantics<parallel>], iteration_bounds = array<i64: 1, 4>, scalar_prefetch = 0 : i64, scratch_operands = 0 : i64, tpu.core_type = #tpu.core_type<tc>, window_params = [{transform_indices = @transform_0, window_bounds = array<i64: 32, 128>}, {transform_indices = @transform_1, window_bounds = array<i64: 128, 640>}, {transform_indices = @transform_2, window_bounds = array<i64: 1, 640>}, {transform_indices = @transform_3, window_bounds = array<i64: 32, 640>}]} {
    %c0 = arith.constant 0 : index
    %c0_0 = arith.constant 0 : index
    %0 = vector.load %arg2[%c0, %c0_0] : memref<32x128xbf16, #tpu.memory_space<vmem>>, vector<32x128xbf16>
    %c0_1 = arith.constant 0 : index
    %c0_2 = arith.constant 0 : index
    %1 = vector.load %arg3[%c0_1, %c0_2] : memref<128x640xbf16, #tpu.memory_space<vmem>>, vector<128x640xbf16>
    %cst = arith.constant dense<0.000000e+00> : vector<32x640xf32>
    %2 = tpu.matmul %0, %1, %cst {dimension_numbers = #tpu.dot_dimension_numbers<[1], [0], [0], [1], [0, 0, 1, 1], [], []>} : vector<32x128xbf16>, vector<128x640xbf16>, vector<32x640xf32> -> vector<32x640xf32>
    %c0_3 = arith.constant 0 : index
    %c0_4 = arith.constant 0 : index
    %3 = vector.load %arg4[%c0_3, %c0_4] : memref<1x640xf32, #tpu.memory_space<vmem>>, vector<1x640xf32>
    %4 = vector.broadcast %3 : vector<1x640xf32> to vector<32x640xf32>
    %5 = arith.addf %2, %4 : vector<32x640xf32>
    %6 = arith.truncf %5 : vector<32x640xf32> to vector<32x640xbf16>
    %c0_5 = arith.constant 0 : index
    %c0_6 = arith.constant 0 : index
    %7 = vector.load %arg5[%c0_5, %c0_6] : memref<32x640xbf16, #tpu.memory_space<vmem>>, vector<32x640xbf16>
    tpu.vector_store %arg5[%c0_5, %c0_6], %6 {strides = array<i32>} : memref<32x640xbf16, #tpu.memory_space<vmem>>, vector<32x640xbf16>,
    return
  }
  func.func @transform_0(%arg0: i32, %arg1: i32) -> (i32, i32) {
    %c0_i32 = arith.constant 0 : i32
    %c0_i32_0 = arith.constant 0 : i32
    return %arg0, %c0_i32 : i32, i32
  }
  func.func @transform_1(%arg0: i32, %arg1: i32) -> (i32, i32) {
    %c0_i32 = arith.constant 0 : i32
    %c0_i32_0 = arith.constant 0 : i32
    return %c0_i32, %arg1 : i32, i32
  }
  func.func @transform_2(%arg0: i32, %arg1: i32) -> (i32, i32) {
    %c0_i32 = arith.constant 0 : i32
    %c0_i32_0 = arith.constant 0 : i32
    return %c0_i32, %arg1 : i32, i32
  }
  func.func @transform_3(%arg0: i32, %arg1: i32) -> (i32, i32) {
    %c0_i32 = arith.constant 0 : i32
    return %arg0, %arg1 : i32, i32
  }
}

</mosaic_0001>

<llo_original>
// kernel: vae_forward.3
$region0: #{vae_forward.3}
  #allocation0 [shape = 'u32[]', space=smem, size = 0x4, offset = 0x4, fixed_abs, tag = 'smem constant byte address 0x4 - core index']
  #allocation1 [shape = 'u32[144,128]{1,0:T(1,128)}', space=vmem, size = 0x12000, scoped, tag = 'internal scratch']
  %s0 = inlined_call_operand.vmem [shape: bf16[32,128], index: 0, kind: input, shape index: {}]
  %s1 = inlined_call_operand.vmem [shape: bf16[128,2560], index: 1, kind: input, shape index: {}]
  %s2 = inlined_call_operand.vmem [shape: f32[1,2560], index: 2, kind: input, shape index: {}]
  %s3 = inlined_call_operand.hbm [shape: bf16[32,2560], index: 3, kind: output, shape index: {}]
  %s4 = sld [smem:[#allocation0]]
  $region71: #{vae_forward.3} parent=0
    _
  %s6 = ssub.s32 1, %s4
  %s7 = scalar_select 0, %s6, %s4
  $region1: #{vae_forward.3} parent=0
    #allocation2 [shape = 'u8[327680]{0}', space=vmem, size = 0x50000, scoped, tag = 'input window, operand 1']
    #allocation3 [shape = 'u8[81920]{0}', space=vmem, size = 0x14000, scoped, tag = 'output window, operand 0']
    #allocation4 [shape = 's32[2]{0}', space=sflag, size = 0x8, scoped, tag = 'scoped memory for vae_forward.3']
    %8 = vsyncpa [#allocation4], 0
    %s9 = scalar_lea.sflag [#allocation4], 1
    %10 = vsyncpa %s9, 0
    loop: start=0, step=1, limit=6
    $region2: #{vae_forward.3} parent=1 // loop_pre_header
      _
    $region3: #{vae_forward.3} parent=1 // loop_header
      %s12 = sphi 0, %s16
      %p13 = scmp.ge.s32.totalorder %s12, 6
      %s19 = sphi 0, %s31
      %s20 = sphi 0, %s27
      %s21 = sphi 0, %s19
      %s22 = sphi 0, %s20
      %s23 = sphi 0, %s21
      %s24 = sphi 0, %s22
      %s34 = sphi 0, %s36
      %s37 = sphi 0, %s34
      %s38 = sphi 0, %s37
      %s54 = sphi 0, %s38
      %s60 = sphi 0, %s62
      %s63 = sphi 0, %s60
      %s64 = sphi 0, %s63
      %s80 = sphi 0, %s64
      %s86 = sphi 0, %s88
      %s89 = sphi 0, %s86
      %s90 = sphi 0, %s89
      %s106 = sphi 0, %s90
      %s114 = sphi 0, %s116
      %s117 = sphi 0, %s114
      %s118 = sphi 0, %s117
      %s134 = sphi 0, %s118
    $region4: #{vae_forward.3} parent=1 // loop_header_branch
      %15 = sbr.rel (%p13) target = $region8
    $region5: #{vae_forward.3} parent=1 // loop_body
      %s17 = ssub.s32 %s12, 1
      %s18 = ssub.s32 %s12, 2
      %s25 = sadd.s32 1, %s20
      %p26 = scmp.ge.s32.totalorder %s25, 4
      %s27 = scalar_select %p26, 0, %s25
      %s28 = sadd.s32 1, %s19
      %s29 = scalar_select %p26, %s28, %s19
      %p30 = scmp.ge.s32.totalorder %s29, 1
      %s31 = scalar_select %p30, 0, %s29
      %s32 = ssub.s32 %s19, %s31
      %p33 = scmp.eq.s32.totalorder %s32, 0
      %s35 = sadd.s32 %s34, 1
      %s36 = scalar_select %p33, %s34, %s35
      %p39 = pneg %p33
      %p40 = scmp.eq.s32.totalorder %s12, 3
      %p41 = por %p39, %p40
      %p42 = scmp.ne.s32.totalorder %s34, %s37
      %p43 = scmp.eq.s32.totalorder %s12, 0
      %p44 = por %p42, %p43
      %p45 = scmp.ne.s32.totalorder %s34, %s37
      %p46 = scmp.eq.s32.totalorder %s17, 3
      %p47 = por %p45, %p46
      %p48 = scmp.ne.s32.totalorder %s37, %s38
      %p49 = scmp.eq.s32.totalorder %s17, 0
      %p50 = por %p48, %p49
      %p51 = scmp.ne.s32.totalorder %s37, %s38
      %p52 = scmp.eq.s32.totalorder %s18, 3
      %p53 = por %p51, %p52
      %p55 = scmp.ne.s32.totalorder %s38, %s54
      %p56 = scmp.eq.s32.totalorder %s18, 0
      %p57 = por %p55, %p56
      %s58 = ssub.s32 %s20, %s27
      %p59 = scmp.eq.s32.totalorder %s58, 0
      %s61 = sadd.s32 %s60, 1
      %s62 = scalar_select %p59, %s60, %s61
      %p65 = pneg %p59
      %p66 = scmp.eq.s32.totalorder %s12, 3
      %p67 = por %p65, %p66
      %p68 = scmp.ne.s32.totalorder %s60, %s63
      %p69 = scmp.eq.s32.totalorder %s12, 0
      %p70 = por %p68, %p69
      %p71 = scmp.ne.s32.totalorder %s60, %s63
      %p72 = scmp.eq.s32.totalorder %s17, 3
      %p73 = por %p71, %p72
      %p74 = scmp.ne.s32.totalorder %s63, %s64
      %p75 = scmp.eq.s32.totalorder %s17, 0
      %p76 = por %p74, %p75
      %p77 = scmp.ne.s32.totalorder %s63, %s64
      %p78 = scmp.eq.s32.totalorder %s18, 3
      %p79 = por %p77, %p78
      %p81 = scmp.ne.s32.totalorder %s64, %s80
      %p82 = scmp.eq.s32.totalorder %s18, 0
      %p83 = por %p81, %p82
      %s84 = ssub.s32 %s20, %s27
      %p85 = scmp.eq.s32.totalorder %s84, 0
      %s87 = sadd.s32 %s86, 1
      %s88 = scalar_select %p85, %s86, %s87
      %p91 = pneg %p85
      %p92 = scmp.eq.s32.totalorder %s12, 3
      %p93 = por %p91, %p92
      %p94 = scmp.ne.s32.totalorder %s86, %s89
      %p95 = scmp.eq.s32.totalorder %s12, 0
      %p96 = por %p94, %p95
      %p97 = scmp.ne.s32.totalorder %s86, %s89
      %p98 = scmp.eq.s32.totalorder %s17, 3
      %p99 = por %p97, %p98
      %p100 = scmp.ne.s32.totalorder %s89, %s90
      %p101 = scmp.eq.s32.totalorder %s17, 0
      %p102 = por %p100, %p101
      %p103 = scmp.ne.s32.totalorder %s89, %s90
      %p104 = scmp.eq.s32.totalorder %s18, 3
      %p105 = por %p103, %p104
      %p107 = scmp.ne.s32.totalorder %s90, %s106
      %p108 = scmp.eq.s32.totalorder %s18, 0
      %p109 = por %p107, %p108
      %s110 = ssub.s32 %s19, %s31
      %s111 = ssub.s32 %s20, %s27
      %s112 = sor.u32 %s110, %s111
      %p113 = scmp.eq.s32.totalorder %s112, 0
      %s115 = sadd.s32 %s114, 1
      %s116 = scalar_select %p113, %s114, %s115
      %p119 = pneg %p113
      %p120 = scmp.eq.s32.totalorder %s12, 3
      %p121 = por %p119, %p120
      %p122 = scmp.ne.s32.totalorder %s114, %s117
      %p123 = scmp.eq.s32.totalorder %s12, 0
      %p124 = por %p122, %p123
      %p125 = scmp.ne.s32.totalorder %s114, %s117
      %p126 = scmp.eq.s32.totalorder %s17, 3
      %p127 = por %p125, %p126
      %p128 = scmp.ne.s32.totalorder %s117, %s118
      %p129 = scmp.eq.s32.totalorder %s17, 0
      %p130 = por %p128, %p129
      %p131 = scmp.ne.s32.totalorder %s117, %s118
      %p132 = scmp.eq.s32.totalorder %s18, 3
      %p133 = por %p131, %p132
      %p135 = scmp.ne.s32.totalorder %s118, %s134
      %p136 = scmp.eq.s32.totalorder %s18, 0
      %p137 = por %p135, %p136
      %p138 = scmp.le.s32.totalorder 1, %s12
      %p139 = scmp.lt.s32.totalorder %s12, 5
      %p140 = pnand %p138, %p139
      %p141 = pneg %p140
      // Predicated region
      $region9: #{vae_forward.3} parent=5 // pred_check
        _
      $region10: #{vae_forward.3} parent=5 // pred_check_branch
        %143 = sbr.rel (%p140) target = $region12
      $region11: #{vae_forward.3} parent=5 // pred_region
        %s144 = ssub.s32 %s12, 1
        // Predicated region
        $region13: #{vae_forward.3} parent=11 // pred_check
          %p145 = pneg %p50
        $region14: #{vae_forward.3} parent=11 // pred_check_branch
          %147 = sbr.rel (%p145) target = $region16
        $region15: #{vae_forward.3} parent=11 // pred_region
          %s148 = smul.u32 4, %s21
          %p149 = scmp.lt.s32.totalorder %s148, 3
          %s150 = scalar_select %p149, %s148, 3
          %s151 = smul.addr %s150, 4
          %s152 = scalar_lea.vmem %s0, %s151
          %s153 = smul.u32 4, %s21
        $region16: #{vae_forward.3} parent=11 // pred_fallthru
          _
      $region12: #{vae_forward.3} parent=5 // pred_fallthru
        _
      %p154 = scmp.lt.s32.totalorder %s12, 4
      // Predicated region
      $region17: #{vae_forward.3} parent=5 // pred_check
        %p155 = pneg %p154
      $region18: #{vae_forward.3} parent=5 // pred_check_branch
        %157 = sbr.rel (%p155) target = $region20
      $region19: #{vae_forward.3} parent=5 // pred_region
        // Predicated region
        $region21: #{vae_forward.3} parent=19 // pred_check
          %p158 = pneg %p70
        $region22: #{vae_forward.3} parent=19 // pred_check_branch
          %160 = sbr.rel (%p158) target = $region24
        $region23: #{vae_forward.3} parent=19 // pred_region
          %s161 = sand.u32 %s60, 1
          %s162 = sand.u32 %s60, 1
          %s163 = smul.addr %s162, 320
          %s164 = scalar_lea.vmem [#allocation2], %s163
          %s165 = smul.u32 5, %s20
          %s166 = smul.addr %s165, 4
          %s167 = scalar_lea.vmem %s1, %s166
          // Predicated region
          $region25: #{vae_forward.3} parent=23 // pred_check
            _
          $region26: #{vae_forward.3} parent=23 // pred_check_branch
            %169 = sbr.rel (0) target = $region28
          $region27: #{vae_forward.3} parent=23 // pred_region
            // Predicated region
            $region29: #{vae_forward.3} parent=27 // pred_check
              _
            $region30: #{vae_forward.3} parent=27 // pred_check_branch
              %171 = sbr.rel (0) target = $region32
            $region31: #{vae_forward.3} parent=27 // pred_region
              %s172 = scalar_lea.vmem %s167, 16
              %s173 = scalar_lea.vmem %s164, 16 [#allocation2]
              loop: start=0, step=1, limit=1
              $region33: #{vae_forward.3} parent=31 // loop_pre_header
                _
              $region34: #{vae_forward.3} parent=31 // loop_header
                %s175 = sphi 0, %s179
                %p176 = scmp.ge.s32.totalorder %s175, 1
                %s180 = sphi %s167, %s167
                %s181 = sphi %s164, %s164
              $region35: #{vae_forward.3} parent=31 // loop_header_branch
                %178 = sbr.rel (%p176) target = $region39
              $region36: #{vae_forward.3} parent=31 // loop_body
                %v182 = vld [vmem:[%s180] sm:$0xff]
                %183 = vst [vmem:[%s181] sm:$0xff] %v182
                %v184 = vld [vmem:[%s180 + $0x8] sm:$0xff]
                %185 = vst [vmem:[%s181 + $0x8] sm:$0xff] %v184
                %v186 = vld [vmem:[%s180 + $0x50] sm:$0xff]
                %187 = vst [vmem:[%s181 + $0x14] sm:$0xff] %v186
                %v188 = vld [vmem:[%s180 + $0x58] sm:$0xff]
                %189 = vst [vmem:[%s181 + $0x1c] sm:$0xff] %v188
                %v190 = vld [vmem:[%s180 + $0xa0] sm:$0xff]
                %191 = vst [vmem:[%s181 + $0x28] sm:$0xff] %v190
                %v192 = vld [vmem:[%s180 + $0xa8] sm:$0xff]
                %193 = vst [vmem:[%s181 + $0x30] sm:$0xff] %v192
                %v194 = vld [vmem:[%s180 + $0xf0] sm:$0xff]
                %195 = vst [vmem:[%s181 + $0x3c] sm:$0xff] %v194
                %v196 = vld [vmem:[%s180 + $0xf8] sm:$0xff]
                %197 = vst [vmem:[%s181 + $0x44] sm:$0xff] %v196
                %v198 = vld [vmem:[%s180 + $0x140] sm:$0xff]
                %199 = vst [vmem:[%s181 + $0x50] sm:$0xff] %v198
                %v200 = vld [vmem:[%s180 + $0x148] sm:$0xff]
                %201 = vst [vmem:[%s181 + $0x58] sm:$0xff] %v200
                %v202 = vld [vmem:[%s180 + $0x190] sm:$0xff]
                %203 = vst [vmem:[%s181 + $0x64] sm:$0xff] %v202
                %v204 = vld [vmem:[%s180 + $0x198] sm:$0xff]
                %205 = vst [vmem:[%s181 + $0x6c] sm:$0xff] %v204
                %v206 = vld [vmem:[%s180 + $0x1e0] sm:$0xff]
                %207 = vst [vmem:[%s181 + $0x78] sm:$0xff] %v206
                %v208 = vld [vmem:[%s180 + $0x1e8] sm:$0xff]
                %209 = vst [vmem:[%s181 + $0x80] sm:$0xff] %v208
                %v210 = vld [vmem:[%s180 + $0x230] sm:$0xff]
                %211 = vst [vmem:[%s181 + $0x8c] sm:$0xff] %v210
                %v212 = vld [vmem:[%s180 + $0x238] sm:$0xff]
                %213 = vst [vmem:[%s181 + $0x94] sm:$0xff] %v212
                %v214 = vld [vmem:[%s180 + $0x280] sm:$0xff]
                %215 = vst [vmem:[%s181 + $0xa0] sm:$0xff] %v214
                %v216 = vld [vmem:[%s180 + $0x288] sm:$0xff]
                %217 = vst [vmem:[%s181 + $0xa8] sm:$0xff] %v216
                %v218 = vld [vmem:[%s180 + $0x2d0] sm:$0xff]
                %219 = vst [vmem:[%s181 + $0xb4] sm:$0xff] %v218
                %v220 = vld [vmem:[%s180 + $0x2d8] sm:$0xff]
                %221 = vst [vmem:[%s181 + $0xbc] sm:$0xff] %v220
                %v222 = vld [vmem:[%s180 + $0x320] sm:$0xff]
                %223 = vst [vmem:[%s181 + $0xc8] sm:$0xff] %v222
                %v224 = vld [vmem:[%s180 + $0x328] sm:$0xff]
                %225 = vst [vmem:[%s181 + $0xd0] sm:$0xff] %v224
                %v226 = vld [vmem:[%s180 + $0x370] sm:$0xff]
                %227 = vst [vmem:[%s181 + $0xdc] sm:$0xff] %v226
                %v228 = vld [vmem:[%s180 + $0x378] sm:$0xff]
                %229 = vst [vmem:[%s181 + $0xe4] sm:$0xff] %v228
                %v230 = vld [vmem:[%s180 + $0x3c0] sm:$0xff]
                %231 = vst [vmem:[%s181 + $0xf0] sm:$0xff] %v230
                %v232 = vld [vmem:[%s180 + $0x3c8] sm:$0xff]
                %233 = vst [vmem:[%s181 + $0xf8] sm:$0xff] %v232
                %v234 = vld [vmem:[%s180 + $0x410] sm:$0xff]
                %235 = vst [vmem:[%s181 + $0x104] sm:$0xff] %v234
                %v236 = vld [vmem:[%s180 + $0x418] sm:$0xff]
                %237 = vst [vmem:[%s181 + $0x10c] sm:$0xff] %v236
                %v238 = vld [vmem:[%s180 + $0x460] sm:$0xff]
                %239 = vst [vmem:[%s181 + $0x118] sm:$0xff] %v238
                %v240 = vld [vmem:[%s180 + $0x468] sm:$0xff]
                %241 = vst [vmem:[%s181 + $0x120] sm:$0xff] %v240
                %v242 = vld [vmem:[%s180 + $0x4b0] sm:$0xff]
                %243 = vst [vmem:[%s181 + $0x12c] sm:$0xff] %v242
                %v244 = vld [vmem:[%s180 + $0x4b8] sm:$0xff]
                %245 = vst [vmem:[%s181 + $0x134] sm:$0xff] %v244
              $region37: #{vae_forward.3} parent=31 // loop_footer
                %s179 = sadd.s32 1, %s175
              $region38: #{vae_forward.3} parent=31 // loop_footer_branch
                %174 = sbr.rel target = $region34
              $region39: #{vae_forward.3} parent=31 // loop_exit
                _
              loop: start=0, step=1, limit=1
              $region40: #{vae_forward.3} parent=31 // loop_pre_header
                _
              $region41: #{vae_forward.3} parent=31 // loop_header
                %s248 = sphi 0, %s252
                %p249 = scmp.ge.s32.totalorder %s248, 1
                %s253 = sphi %s172, %s172
                %s254 = sphi %s173, %s173
              $region42: #{vae_forward.3} parent=31 // loop_header_branch
                %251 = sbr.rel (%p249) target = $region46
              $region43: #{vae_forward.3} parent=31 // loop_body
                %v255 = vld [vmem:[%s253] sm:$0xf]
                %256 = vst [vmem:[%s254] sm:$0xf] %v255
                %v257 = vld [vmem:[%s253 + $0x50] sm:$0xf]
                %258 = vst [vmem:[%s254 + $0x14] sm:$0xf] %v257
                %v259 = vld [vmem:[%s253 + $0xa0] sm:$0xf]
                %260 = vst [vmem:[%s254 + $0x28] sm:$0xf] %v259
                %v261 = vld [vmem:[%s253 + $0xf0] sm:$0xf]
                %262 = vst [vmem:[%s254 + $0x3c] sm:$0xf] %v261
                %v263 = vld [vmem:[%s253 + $0x140] sm:$0xf]
                %264 = vst [vmem:[%s254 + $0x50] sm:$0xf] %v263
                %v265 = vld [vmem:[%s253 + $0x190] sm:$0xf]
                %266 = vst [vmem:[%s254 + $0x64] sm:$0xf] %v265
                %v267 = vld [vmem:[%s253 + $0x1e0] sm:$0xf]
                %268 = vst [vmem:[%s254 + $0x78] sm:$0xf] %v267
                %v269 = vld [vmem:[%s253 + $0x230] sm:$0xf]
                %270 = vst [vmem:[%s254 + $0x8c] sm:$0xf] %v269
                %v271 = vld [vmem:[%s253 + $0x280] sm:$0xf]
                %272 = vst [vmem:[%s254 + $0xa0] sm:$0xf] %v271
                %v273 = vld [vmem:[%s253 + $0x2d0] sm:$0xf]
                %274 = vst [vmem:[%s254 + $0xb4] sm:$0xf] %v273
                %v275 = vld [vmem:[%s253 + $0x320] sm:$0xf]
                %276 = vst [vmem:[%s254 + $0xc8] sm:$0xf] %v275
                %v277 = vld [vmem:[%s253 + $0x370] sm:$0xf]
                %278 = vst [vmem:[%s254 + $0xdc] sm:$0xf] %v277
                %v279 = vld [vmem:[%s253 + $0x3c0] sm:$0xf]
                %280 = vst [vmem:[%s254 + $0xf0] sm:$0xf] %v279
                %v281 = vld [vmem:[%s253 + $0x410] sm:$0xf]
                %282 = vst [vmem:[%s254 + $0x104] sm:$0xf] %v281
                %v283 = vld [vmem:[%s253 + $0x460] sm:$0xf]
                %284 = vst [vmem:[%s254 + $0x118] sm:$0xf] %v283
                %v285 = vld [vmem:[%s253 + $0x4b0] sm:$0xf]
                %286 = vst [vmem:[%s254 + $0x12c] sm:$0xf] %v285
              $region44: #{vae_forward.3} parent=31 // loop_footer
                %s252 = sadd.s32 1, %s248
              $region45: #{vae_forward.3} parent=31 // loop_footer_branch
                %247 = sbr.rel target = $region41
              $region46: #{vae_forward.3} parent=31 // loop_exit
                _
            $region32: #{vae_forward.3} parent=27 // pred_fallthru
              _
          $region28: #{vae_forward.3} parent=23 // pred_fallthru
            _
          %287 = vnop
        $region24: #{vae_forward.3} parent=19 // pred_fallthru
          _
        // Predicated region
        $region47: #{vae_forward.3} parent=19 // pred_check
          %p288 = pneg %p96
        $region48: #{vae_forward.3} parent=19 // pred_check_branch
          %290 = sbr.rel (%p288) target = $region50
        $region49: #{vae_forward.3} parent=19 // pred_region
          %s291 = smul.u32 5, %s20
          %p292 = scmp.lt.s32.totalorder %s291, 19
          %s293 = scalar_select %p292, %s291, 19
          %s294 = scalar_lea.vmem %s2, %s293
          %s295 = smul.u32 5, %s20
        $region50: #{vae_forward.3} parent=19 // pred_fallthru
          _
      $region20: #{vae_forward.3} parent=5 // pred_fallthru
        _
      %p296 = scmp.le.s32.totalorder 1, %s12
      %p297 = scmp.lt.s32.totalorder %s12, 5
      %p298 = pnand %p296, %p297
      %p299 = pneg %p298
      // Predicated region
      $region51: #{vae_forward.3} parent=5 // pred_check
        _
      $region52: #{vae_forward.3} parent=5 // pred_check_branch
        %301 = sbr.rel (%p298) target = $region54
      $region53: #{vae_forward.3} parent=5 // pred_region
        %s302 = ssub.s32 %s12, 1
        %s303 = sand.u32 %s63, 1
        %s304 = sand.u32 %s63, 1
        %s305 = smul.addr %s304, 320
        %s306 = scalar_lea.vmem [#allocation2], %s305
        // Predicated region
        $region55: #{vae_forward.3} parent=53 // pred_check
          %p307 = pneg %p76
        $region56: #{vae_forward.3} parent=53 // pred_check_branch
          %309 = sbr.rel (%p307) target = $region58
        $region57: #{vae_forward.3} parent=53 // pred_region
          _
        $region58: #{vae_forward.3} parent=53 // pred_fallthru
          _
        %s310 = smul.u32 4, %s21
        %p311 = scmp.lt.s32.totalorder %s310, 3
        %s312 = scalar_select %p311, %s310, 3
        %s313 = smul.addr %s312, 4
        %s314 = scalar_lea.vmem %s0, %s313
        %p315 = pneg %p50
        %p316 = pneg %p47
        %s317 = sand.u32 %s63, 1
        %s318 = sand.u32 %s63, 1
        %s319 = smul.addr %s318, 320
        %s320 = scalar_lea.vmem [#allocation2], %s319
        %p321 = pneg %p76
        %p322 = pneg %p73
        %s323 = smul.u32 5, %s22
        %p324 = scmp.lt.s32.totalorder %s323, 19
        %s325 = scalar_select %p324, %s323, 19
        %s326 = scalar_lea.vmem %s2, %s325
        %p327 = pneg %p102
        %p328 = pneg %p99
        %p329 = pneg %p130
        %p330 = pneg %p127
        %s331 = sand.u32 %s117, 1
        %s332 = scalar_lea.sflag [#allocation4], %s331
        %s333 = sand.u32 %s117, 1
        %s334 = smul.addr %s333, 80
        %s335 = scalar_lea.vmem [#allocation3], %s334
        %s336 = smul.u32 4, %s21
        %p337 = scmp.lt.s32.totalorder %s336, 3
        %s338 = scalar_select %p337, %s336, 3
        %s339 = smul.addr %s338, 4
        %s340 = scalar_lea.vmem %s0, %s339
        %s341 = smul.u32 4, %s21
        %s342 = smul.u32 5, %s22
        %s343 = smul.u32 5, %s22
        %p344 = scmp.lt.s32.totalorder %s343, 19
        %s345 = scalar_select %p344, %s343, 19
        %s346 = scalar_lea.vmem %s2, %s345
        %s347 = smul.u32 5, %s22
        %s348 = smul.u32 4, %s21
        %s349 = smul.u32 5, %s22
        %v351 = vld [vmem:[%s340] sm:$0xf]
        %v352 = vld [vmem:[%s340 + $0x4] sm:$0xf]
        %v353 = vld [vmem:[%s340 + $0x8] sm:$0xf]
        %v354 = vld [vmem:[%s340 + $0xc] sm:$0xf]
        %v355 = vld [vmem:[%s306] sm:$0xff]
        %v356 = vld [vmem:[%s306 + $0x8] sm:$0xff]
        %v357 = vld [vmem:[%s306 + $0x10] sm:$0xf]
        %v358 = vld [vmem:[%s306 + $0x14] sm:$0xff]
        %v359 = vld [vmem:[%s306 + $0x1c] sm:$0xff]
        %v360 = vld [vmem:[%s306 + $0x24] sm:$0xf]
        %v361 = vld [vmem:[%s306 + $0x28] sm:$0xff]
        %v362 = vld [vmem:[%s306 + $0x30] sm:$0xff]
        %v363 = vld [vmem:[%s306 + $0x38] sm:$0xf]
        %v364 = vld [vmem:[%s306 + $0x3c] sm:$0xff]
        %v365 = vld [vmem:[%s306 + $0x44] sm:$0xff]
        %v366 = vld [vmem:[%s306 + $0x4c] sm:$0xf]
        %v367 = vld [vmem:[%s306 + $0x50] sm:$0xff]
        %v368 = vld [vmem:[%s306 + $0x58] sm:$0xff]
        %v369 = vld [vmem:[%s306 + $0x60] sm:$0xf]
        %v370 = vld [vmem:[%s306 + $0x64] sm:$0xff]
        %v371 = vld [vmem:[%s306 + $0x6c] sm:$0xff]
        %v372 = vld [vmem:[%s306 + $0x74] sm:$0xf]
        %v373 = vld [vmem:[%s306 + $0x78] sm:$0xff]
        %v374 = vld [vmem:[%s306 + $0x80] sm:$0xff]
        %v375 = vld [vmem:[%s306 + $0x88] sm:$0xf]
        %v376 = vld [vmem:[%s306 + $0x8c] sm:$0xff]
        %v377 = vld [vmem:[%s306 + $0x94] sm:$0xff]
        %v378 = vld [vmem:[%s306 + $0x9c] sm:$0xf]
        %v379 = vld [vmem:[%s306 + $0xa0] sm:$0xff]
        %v380 = vld [vmem:[%s306 + $0xa8] sm:$0xff]
        %v381 = vld [vmem:[%s306 + $0xb0] sm:$0xf]
        %v382 = vld [vmem:[%s306 + $0xb4] sm:$0xff]
        %v383 = vld [vmem:[%s306 + $0xbc] sm:$0xff]
        %v384 = vld [vmem:[%s306 + $0xc4] sm:$0xf]
        %v385 = vld [vmem:[%s306 + $0xc8] sm:$0xff]
        %v386 = vld [vmem:[%s306 + $0xd0] sm:$0xff]
        %v387 = vld [vmem:[%s306 + $0xd8] sm:$0xf]
        %v388 = vld [vmem:[%s306 + $0xdc] sm:$0xff]
        %v389 = vld [vmem:[%s306 + $0xe4] sm:$0xff]
        %v390 = vld [vmem:[%s306 + $0xec] sm:$0xf]
        %v391 = vld [vmem:[%s306 + $0xf0] sm:$0xff]
        %v392 = vld [vmem:[%s306 + $0xf8] sm:$0xff]
        %v393 = vld [vmem:[%s306 + $0x100] sm:$0xf]
        %v394 = vld [vmem:[%s306 + $0x104] sm:$0xff]
        %v395 = vld [vmem:[%s306 + $0x10c] sm:$0xff]
        %v396 = vld [vmem:[%s306 + $0x114] sm:$0xf]
        %v397 = vld [vmem:[%s306 + $0x118] sm:$0xff]
        %v398 = vld [vmem:[%s306 + $0x120] sm:$0xff]
        %v399 = vld [vmem:[%s306 + $0x128] sm:$0xf]
        %v400 = vld [vmem:[%s306 + $0x12c] sm:$0xff]
        %v401 = vld [vmem:[%s306 + $0x134] sm:$0xff]
        %v402 = vld [vmem:[%s306 + $0x13c] sm:$0xf]
        %v403 = vld [vmem:[%s346] sm:$0x1f]
        %v405 = vlaneseq
        %v406 = vshrl.u32 %v405, 7
        %v407 = vsub.s32 0, %v406
        %v408 = vrot.slane %v403, %v407
        %v409 = vlaneseq
        %v410 = vshrl.u32 %v409, 7
        %v411 = vsub.s32 1, %v410
        %v412 = vrot.slane %v403, %v411
        %v413 = vlaneseq
        %v414 = vshrl.u32 %v413, 7
        %v415 = vsub.s32 2, %v414
        %v416 = vrot.slane %v403, %v415
        %v417 = vlaneseq
        %v418 = vshrl.u32 %v417, 7
        %v419 = vsub.s32 3, %v418
        %v420 = vrot.slane %v403, %v419
        %v421 = vlaneseq
        %v422 = vshrl.u32 %v421, 7
        %v423 = vsub.s32 4, %v422
        %v424 = vrot.slane %v403, %v423
        %v434 = vunpack.c.l.b16 %v351
        %v435 = vunpack.c.l.b16 %v352
        %v436 = vunpack.c.l.b16 %v353
        %v437 = vunpack.c.l.b16 %v354
        %v438 = vpack.c.b16 %v435, %v434
        %v439 = vpack.c.b16 %v437, %v436
        %v490 = vunpack.c.l.b16 %v355
        %v491 = vunpack.c.h.b16 %v355
        %v492 = vunpack.c.l.b16 %v356
        %v493 = vunpack.c.h.b16 %v356
        %v494 = vunpack.c.l.b16 %v357
        %v495 = vunpack.c.l.b16 %v358
        %v496 = vunpack.c.h.b16 %v358
        %v497 = vunpack.c.l.b16 %v359
        %v498 = vunpack.c.h.b16 %v359
        %v499 = vunpack.c.l.b16 %v360
        %v500 = vunpack.c.l.b16 %v361
        %v501 = vunpack.c.h.b16 %v361
        %v502 = vunpack.c.l.b16 %v362
        %v503 = vunpack.c.h.b16 %v362
        %v504 = vunpack.c.l.b16 %v363
        %v505 = vunpack.c.l.b16 %v364
        %v506 = vunpack.c.h.b16 %v364
        %v507 = vunpack.c.l.b16 %v365
        %v508 = vunpack.c.h.b16 %v365
        %v509 = vunpack.c.l.b16 %v366
        %v510 = vunpack.c.l.b16 %v367
        %v511 = vunpack.c.h.b16 %v367
        %v512 = vunpack.c.l.b16 %v368
        %v513 = vunpack.c.h.b16 %v368
        %v514 = vunpack.c.l.b16 %v369
        %v515 = vunpack.c.l.b16 %v370
        %v516 = vunpack.c.h.b16 %v370
        %v517 = vunpack.c.l.b16 %v371
        %v518 = vunpack.c.h.b16 %v371
        %v519 = vunpack.c.l.b16 %v372
        %v520 = vunpack.c.l.b16 %v373
        %v521 = vunpack.c.h.b16 %v373
        %v522 = vunpack.c.l.b16 %v374
        %v523 = vunpack.c.h.b16 %v374
        %v524 = vunpack.c.l.b16 %v375
        %v525 = vunpack.c.l.b16 %v376
        %v526 = vunpack.c.h.b16 %v376
        %v527 = vunpack.c.l.b16 %v377
        %v528 = vunpack.c.h.b16 %v377
        %v529 = vunpack.c.l.b16 %v378
        %v530 = vunpack.c.l.b16 %v379
        %v531 = vunpack.c.h.b16 %v379
        %v532 = vunpack.c.l.b16 %v380
        %v533 = vunpack.c.h.b16 %v380
        %v534 = vunpack.c.l.b16 %v381
        %v535 = vunpack.c.l.b16 %v382
        %v536 = vunpack.c.h.b16 %v382
        %v537 = vunpack.c.l.b16 %v383
        %v538 = vunpack.c.h.b16 %v383
        %v539 = vunpack.c.l.b16 %v384
        %v540 = vunpack.c.l.b16 %v385
        %v541 = vunpack.c.h.b16 %v385
        %v542 = vunpack.c.l.b16 %v386
        %v543 = vunpack.c.h.b16 %v386
        %v544 = vunpack.c.l.b16 %v387
        %v545 = vunpack.c.l.b16 %v388
        %v546 = vunpack.c.h.b16 %v388
        %v547 = vunpack.c.l.b16 %v389
        %v548 = vunpack.c.h.b16 %v389
        %v549 = vunpack.c.l.b16 %v390
        %v550 = vunpack.c.l.b16 %v391
        %v551 = vunpack.c.h.b16 %v391
        %v552 = vunpack.c.l.b16 %v392
        %v553 = vunpack.c.h.b16 %v392
        %v554 = vunpack.c.l.b16 %v393
        %v555 = vunpack.c.l.b16 %v394
        %v556 = vunpack.c.h.b16 %v394
        %v557 = vunpack.c.l.b16 %v395
        %v558 = vunpack.c.h.b16 %v395
        %v559 = vunpack.c.l.b16 %v396
        %v560 = vunpack.c.l.b16 %v397
        %v561 = vunpack.c.h.b16 %v397
        %v562 = vunpack.c.l.b16 %v398
        %v563 = vunpack.c.h.b16 %v398
        %v564 = vunpack.c.l.b16 %v399
        %v565 = vunpack.c.l.b16 %v400
        %v566 = vunpack.c.h.b16 %v400
        %v567 = vunpack.c.l.b16 %v401
        %v568 = vunpack.c.h.b16 %v401
        %v569 = vunpack.c.l.b16 %v402
        %v570 = vpack.c.b16 %v495, %v490
        %v571 = vpack.c.b16 %v496, %v491
        %v572 = vpack.c.b16 %v497, %v492
        %v573 = vpack.c.b16 %v498, %v493
        %v574 = vpack.c.b16 %v499, %v494
        %v575 = vpack.c.b16 %v505, %v500
        %v576 = vpack.c.b16 %v506, %v501
        %v577 = vpack.c.b16 %v507, %v502
        %v578 = vpack.c.b16 %v508, %v503
        %v579 = vpack.c.b16 %v509, %v504
        %v580 = vpack.c.b16 %v515, %v510
        %v581 = vpack.c.b16 %v516, %v511
        %v582 = vpack.c.b16 %v517, %v512
        %v583 = vpack.c.b16 %v518, %v513
        %v584 = vpack.c.b16 %v519, %v514
        %v585 = vpack.c.b16 %v525, %v520
        %v586 = vpack.c.b16 %v526, %v521
        %v587 = vpack.c.b16 %v527, %v522
        %v588 = vpack.c.b16 %v528, %v523
        %v589 = vpack.c.b16 %v529, %v524
        %v590 = vpack.c.b16 %v535, %v530
        %v591 = vpack.c.b16 %v536, %v531
        %v592 = vpack.c.b16 %v537, %v532
        %v593 = vpack.c.b16 %v538, %v533
        %v594 = vpack.c.b16 %v539, %v534
        %v595 = vpack.c.b16 %v545, %v540
        %v596 = vpack.c.b16 %v546, %v541
        %v597 = vpack.c.b16 %v547, %v542
        %v598 = vpack.c.b16 %v548, %v543
        %v599 = vpack.c.b16 %v549, %v544
        %v600 = vpack.c.b16 %v555, %v550
        %v601 = vpack.c.b16 %v556, %v551
        %v602 = vpack.c.b16 %v557, %v552
        %v603 = vpack.c.b16 %v558, %v553
        %v604 = vpack.c.b16 %v559, %v554
        %v605 = vpack.c.b16 %v565, %v560
        %v606 = vpack.c.b16 %v566, %v561
        %v607 = vpack.c.b16 %v567, %v562
        %v608 = vpack.c.b16 %v568, %v563
        %v609 = vpack.c.b16 %v569, %v564
        %650 = vmatprep.subr.bf16.mxu0 %v571
        %651 = vmatpush1.bf16.msra.mxu0 %v570
        %652 = vmatprep.subr.bf16.mxu0 %v576
        %653 = vmatpush1.bf16.msra.mxu0 %v575
        %654 = vmatprep.subr.bf16.mxu0 %v581
        %655 = vmatpush1.bf16.msra.mxu0 %v580
        %656 = vmatprep.subr.bf16.mxu0 %v586
        %657 = vmatpush1.bf16.msra.mxu0 %v585
        %658 = vmatprep.subr.bf16.mxu0 %v591
        %659 = vmatpush1.bf16.msra.mxu0 %v590
        %660 = vmatprep.subr.bf16.mxu0 %v596
        %661 = vmatpush1.bf16.msra.mxu0 %v595
        %662 = vmatprep.subr.bf16.mxu0 %v601
        %663 = vmatpush1.bf16.msra.mxu0 %v600
        %664 = vmatprep.subr.bf16.mxu0 %v606
        %665 = vmatpush1.bf16.msra.mxu0 %v605
        %666 = vmatprep.subr.bf16.mxu0 0
        %667 = vmatpush1.bf16.msra.mxu0 0
        %668 = vmatprep.subr.bf16.mxu0 0
        %669 = vmatpush1.bf16.msra.mxu0 0
        %670 = vmatprep.subr.bf16.mxu0 0
        %671 = vmatpush1.bf16.msra.mxu0 0
        %672 = vmatprep.subr.bf16.mxu0 0
        %673 = vmatpush1.bf16.msra.mxu0 0
        %674 = vmatprep.subr.bf16.mxu0 0
        %675 = vmatpush1.bf16.msra.mxu0 0
        %676 = vmatprep.subr.bf16.mxu0 0
        %677 = vmatpush1.bf16.msra.mxu0 0
        %678 = vmatprep.subr.bf16.mxu0 0
        %679 = vmatpush1.bf16.msra.mxu0 0
        %680 = vmatprep.subr.bf16.mxu0 0
        %681 = vmatpush1.bf16.msra.mxu0 0
        %682 = vmatprep.mubr.bf16.mxu0 0
        %683 = vmatmul.mubr.bf16.gmra.mrb[0].mxu0 %v438
        %v684 = vpop.f32.mrb[0].mxu0
        %v685 = vadd.f32 %v408, %v684
        %v686 = vpop.f32.mrb[0].mxu0
        %v687 = vadd.f32 %v412, %v686
        %v688 = vpop.f32.mrb[0].mxu0
        %v689 = vadd.f32 %v408, %v688
        %v690 = vpop.f32.mrb[0].mxu0
        %v691 = vadd.f32 %v412, %v690
        %692 = vmatprep.mubr.bf16.mxu0 0
        %693 = vmatmul.mubr.bf16.gmra.mrb[0].mxu0 %v439
        %v694 = vpop.f32.mrb[0].mxu0
        %v695 = vadd.f32 %v408, %v694
        %v696 = vpop.f32.mrb[0].mxu0
        %v697 = vadd.f32 %v412, %v696
        %v698 = vpop.f32.mrb[0].mxu0
        %v699 = vadd.f32 %v408, %v698
        %v700 = vpop.f32.mrb[0].mxu0
        %v701 = vadd.f32 %v412, %v700
        %702 = vdwg.mxu0
        %703 = vmatprep.subr.bf16.mxu0 %v573
        %704 = vmatpush1.bf16.msra.mxu0 %v572
        %705 = vmatprep.subr.bf16.mxu0 %v578
        %706 = vmatpush1.bf16.msra.mxu0 %v577
        %707 = vmatprep.subr.bf16.mxu0 %v583
        %708 = vmatpush1.bf16.msra.mxu0 %v582
        %709 = vmatprep.subr.bf16.mxu0 %v588
        %710 = vmatpush1.bf16.msra.mxu0 %v587
        %711 = vmatprep.subr.bf16.mxu0 %v593
        %712 = vmatpush1.bf16.msra.mxu0 %v592
        %713 = vmatprep.subr.bf16.mxu0 %v598
        %714 = vmatpush1.bf16.msra.mxu0 %v597
        %715 = vmatprep.subr.bf16.mxu0 %v603
        %716 = vmatpush1.bf16.msra.mxu0 %v602
        %717 = vmatprep.subr.bf16.mxu0 %v608
        %718 = vmatpush1.bf16.msra.mxu0 %v607
        %719 = vmatprep.subr.bf16.mxu0 0
        %720 = vmatpush1.bf16.msra.mxu0 0
        %721 = vmatprep.subr.bf16.mxu0 0
        %722 = vmatpush1.bf16.msra.mxu0 0
        %723 = vmatprep.subr.bf16.mxu0 0
        %724 = vmatpush1.bf16.msra.mxu0 0
        %725 = vmatprep.subr.bf16.mxu0 0
        %726 = vmatpush1.bf16.msra.mxu0 0
        %727 = vmatprep.subr.bf16.mxu0 0
        %728 = vmatpush1.bf16.msra.mxu0 0
        %729 = vmatprep.subr.bf16.mxu0 0
        %730 = vmatpush1.bf16.msra.mxu0 0
        %731 = vmatprep.subr.bf16.mxu0 0
        %732 = vmatpush1.bf16.msra.mxu0 0
        %733 = vmatprep.subr.bf16.mxu0 0
        %734 = vmatpush1.bf16.msra.mxu0 0
        %735 = vmatprep.mubr.bf16.mxu0 0
        %736 = vmatmul.mubr.bf16.gmra.mrb[0].mxu0 %v438
        %v737 = vpop.f32.mrb[0].mxu0
        %v738 = vadd.f32 %v416, %v737
        %v739 = vpop.f32.mrb[0].mxu0
        %v740 = vadd.f32 %v420, %v739
        %v741 = vpop.f32.mrb[0].mxu0
        %v742 = vadd.f32 %v416, %v741
        %v743 = vpop.f32.mrb[0].mxu0
        %v744 = vadd.f32 %v420, %v743
        %745 = vmatprep.mubr.bf16.mxu0 0
        %746 = vmatmul.mubr.bf16.gmra.mrb[0].mxu0 %v439
        %v747 = vpop.f32.mrb[0].mxu0
        %v748 = vadd.f32 %v416, %v747
        %v749 = vpop.f32.mrb[0].mxu0
        %v750 = vadd.f32 %v420, %v749
        %v751 = vpop.f32.mrb[0].mxu0
        %v752 = vadd.f32 %v416, %v751
        %v753 = vpop.f32.mrb[0].mxu0
        %v754 = vadd.f32 %v420, %v753
        %755 = vdwg.mxu0
        %756 = vmatprep.subr.bf16.mxu0 0
        %757 = vmatpush1.bf16.msra.mxu0 %v574
        %758 = vmatprep.subr.bf16.mxu0 0
        %759 = vmatpush1.bf16.msra.mxu0 %v579
        %760 = vmatprep.subr.bf16.mxu0 0
        %761 = vmatpush1.bf16.msra.mxu0 %v584
        %762 = vmatprep.subr.bf16.mxu0 0
        %763 = vmatpush1.bf16.msra.mxu0 %v589
        %764 = vmatprep.subr.bf16.mxu0 0
        %765 = vmatpush1.bf16.msra.mxu0 %v594
        %766 = vmatprep.subr.bf16.mxu0 0
        %767 = vmatpush1.bf16.msra.mxu0 %v599
        %768 = vmatprep.subr.bf16.mxu0 0
        %769 = vmatpush1.bf16.msra.mxu0 %v604
        %770 = vmatprep.subr.bf16.mxu0 0
        %771 = vmatpush1.bf16.msra.mxu0 %v609
        %772 = vmatprep.subr.bf16.mxu0 0
        %773 = vmatpush1.bf16.msra.mxu0 0
        %774 = vmatprep.subr.bf16.mxu0 0
        %775 = vmatpush1.bf16.msra.mxu0 0
        %776 = vmatprep.subr.bf16.mxu0 0
        %777 = vmatpush1.bf16.msra.mxu0 0
        %778 = vmatprep.subr.bf16.mxu0 0
        %779 = vmatpush1.bf16.msra.mxu0 0
        %780 = vmatprep.subr.bf16.mxu0 0
        %781 = vmatpush1.bf16.msra.mxu0 0
        %782 = vmatprep.subr.bf16.mxu0 0
        %783 = vmatpush1.bf16.msra.mxu0 0
        %784 = vmatprep.subr.bf16.mxu0 0
        %785 = vmatpush1.bf16.msra.mxu0 0
        %786 = vmatprep.subr.bf16.mxu0 0
        %787 = vmatpush1.bf16.msra.mxu0 0
        %788 = vmatprep.mubr.bf16.mxu0 0
        %789 = vmatmul.mubr.bf16.gmra.mrb[0].mxu0 %v438
        %v790 = vpop.f32.mrb[0].mxu0
        %v791 = vadd.f32 %v424, %v790
        %v792 = vpop.f32.mrb[0].mxu0
        %v793 = vpop.f32.mrb[0].mxu0
        %v794 = vadd.f32 %v424, %v793
        %v795 = vpop.f32.mrb[0].mxu0
        %796 = vmatprep.mubr.bf16.mxu0 0
        %797 = vmatmul.mubr.bf16.gmra.mrb[0].mxu0 %v439
        %v798 = vpop.f32.mrb[0].mxu0
        %v799 = vadd.f32 %v424, %v798
        %v800 = vpop.f32.mrb[0].mxu0
        %v801 = vpop.f32.mrb[0].mxu0
        %v802 = vadd.f32 %v424, %v801
        %v803 = vpop.f32.mrb[0].mxu0
        %804 = vdwg.mxu0
        %v805 = vpack.c.bf16 %v689, %v685
        %v806 = vpack.c.bf16 %v691, %v687
        %v807 = vpack.c.bf16 %v742, %v738
        %v808 = vpack.c.bf16 %v744, %v740
        %v809 = vpack.c.bf16 %v794, %v791
        %v810 = vpack.c.bf16 %v699, %v695
        %v811 = vpack.c.bf16 %v701, %v697
        %v812 = vpack.c.bf16 %v752, %v748
        %v813 = vpack.c.bf16 %v754, %v750
        %v814 = vpack.c.bf16 %v802, %v799
        %v825 = vunpack.c.l.b16 %v805
        %v826 = vunpack.c.l.b16 %v806
        %v827 = vunpack.c.l.b16 %v807
        %v828 = vunpack.c.l.b16 %v808
        %v829 = vunpack.c.l.b16 %v809
        %v830 = vunpack.c.h.b16 %v805
        %v831 = vunpack.c.h.b16 %v806
        %v832 = vunpack.c.h.b16 %v807
        %v833 = vunpack.c.h.b16 %v808
        %v834 = vunpack.c.h.b16 %v809
        %v835 = vunpack.c.l.b16 %v810
        %v836 = vunpack.c.l.b16 %v811
        %v837 = vunpack.c.l.b16 %v812
        %v838 = vunpack.c.l.b16 %v813
        %v839 = vunpack.c.l.b16 %v814
        %v840 = vunpack.c.h.b16 %v810
        %v841 = vunpack.c.h.b16 %v811
        %v842 = vunpack.c.h.b16 %v812
        %v843 = vunpack.c.h.b16 %v813
        %v844 = vunpack.c.h.b16 %v814
        %v845 = vpack.c.b16 %v826, %v825
        %v846 = vpack.c.b16 %v828, %v827
        %v847 = vpack.c.b16 %v829, %v829
        %v848 = vpack.c.b16 %v831, %v830
        %v849 = vpack.c.b16 %v833, %v832
        %v850 = vpack.c.b16 %v834, %v834
        %v851 = vpack.c.b16 %v836, %v835
        %v852 = vpack.c.b16 %v838, %v837
        %v853 = vpack.c.b16 %v839, %v839
        %v854 = vpack.c.b16 %v841, %v840
        %v855 = vpack.c.b16 %v843, %v842
        %v856 = vpack.c.b16 %v844, %v844
        %869 = vst [vmem:[%s335] sm:$0xff] %v845
        %870 = vst [vmem:[%s335 + $0x8] sm:$0xff] %v846
        %871 = vst [vmem:[%s335 + $0x10] sm:$0xf] %v847
        %872 = vst [vmem:[%s335 + $0x14] sm:$0xff] %v848
        %873 = vst [vmem:[%s335 + $0x1c] sm:$0xff] %v849
        %874 = vst [vmem:[%s335 + $0x24] sm:$0xf] %v850
        %875 = vst [vmem:[%s335 + $0x28] sm:$0xff] %v851
        %876 = vst [vmem:[%s335 + $0x30] sm:$0xff] %v852
        %877 = vst [vmem:[%s335 + $0x38] sm:$0xf] %v853
        %878 = vst [vmem:[%s335 + $0x3c] sm:$0xff] %v854
        %879 = vst [vmem:[%s335 + $0x44] sm:$0xff] %v855
        %880 = vst [vmem:[%s335 + $0x4c] sm:$0xf] %v856
        %s881 = sand.u32 %s117, 1
        %s882 = scalar_lea.sflag [#allocation4], %s881
        %s883 = sand.u32 %s117, 1
        %s884 = smul.addr %s883, 80
        %s885 = scalar_lea.vmem [#allocation3], %s884
        // Predicated region
        $region59: #{vae_forward.3} parent=53 // pred_check
          %p886 = pneg %p127
        $region60: #{vae_forward.3} parent=53 // pred_check_branch
          %888 = sbr.rel (%p886) target = $region62
        $region61: #{vae_forward.3} parent=53 // pred_region
          %s889 = smul.u32 4, %s21
          %s890 = smul.u32 5, %s22
          %s892 = ssub.s32 1280, 1280
          %893 = vsyncadd %s882, %s892
          %s894 = smul.addr %s889, 20
          %s895 = sadd.s32 %s890, %s894
          %s896 = smul.addr %s895, 64
          %s897 = scalar_lea.hbm %s3, %s896
          %s898 = sshll.u32 %s885, 4
          %s899 = int_to_ptr.vmem [resolvable:$true] %s898
          %904 = dma.vmem_to_hbm [thread:$0]  %s899, 1280, %s897, %s882, 320, 1280, 20
        $region62: #{vae_forward.3} parent=53 // pred_fallthru
          _
      $region54: #{vae_forward.3} parent=5 // pred_fallthru
        _
      %p905 = scmp.le.s32.totalorder 2, %s12
      // Predicated region
      $region63: #{vae_forward.3} parent=5 // pred_check
        %p906 = pneg %p905
      $region64: #{vae_forward.3} parent=5 // pred_check_branch
        %908 = sbr.rel (%p906) target = $region66
      $region65: #{vae_forward.3} parent=5 // pred_region
        %s909 = ssub.s32 %s12, 2
        // Predicated region
        $region67: #{vae_forward.3} parent=65 // pred_check
          %p910 = pneg %p133
        $region68: #{vae_forward.3} parent=65 // pred_check_branch
          %912 = sbr.rel (%p910) target = $region70
        $region69: #{vae_forward.3} parent=65 // pred_region
          %s913 = sand.u32 %s118, 1
          %s914 = scalar_lea.sflag [#allocation4], %s913
          %s915 = sand.u32 %s118, 1
          %s916 = smul.addr %s915, 80
          %s917 = scalar_lea.vmem [#allocation3], %s916
          %918 = dma.done %s914, 1280
        $region70: #{vae_forward.3} parent=65 // pred_fallthru
          _
      $region66: #{vae_forward.3} parent=5 // pred_fallthru
        _
    $region6: #{vae_forward.3} parent=1 // loop_footer
      %s16 = sadd.s32 1, %s12
    $region7: #{vae_forward.3} parent=1 // loop_footer_branch
      %11 = sbr.rel target = $region3
    $region8: #{vae_forward.3} parent=1 // loop_exit
      _
    %919 = vsyncpa [#allocation4], 1
    %s920 = scalar_lea.sflag [#allocation4], 1
    %921 = vsyncpa %s920, 1

// kernel: vae_forward.2
$region0: #{vae_forward.2}
  #allocation0 [shape = 'u32[]', space=smem, size = 0x4, offset = 0x4, fixed_abs, tag = 'smem constant byte address 0x4 - core index']
  #allocation1 [shape = 'u32[144,128]{1,0:T(1,128)}', space=vmem, size = 0x12000, scoped, tag = 'internal scratch']
  #allocation2 [shape = 'f32[32,128]{1,0:T(8,128)}', space=vmem, size = 0x4000, scoped, tag = 'scratch operand']
  #allocation3 [shape = 'f32[32,1]{1,0:T(8,128)}', space=vmem, size = 0x4000, scoped, tag = 'scratch operand']
  %s0 = inlined_call_operand.vmem [shape: bf16[32,1536], index: 0, kind: input, shape index: {}]
  %s1 = inlined_call_operand.vmem [shape: bf16[1536,128], index: 1, kind: input, shape index: {}]
  %s2 = inlined_call_operand.hbm [shape: f32[1,128], index: 2, kind: input, shape index: {}]
  %s3 = inlined_call_operand.hbm [shape: bf16[128,128], index: 3, kind: input, shape index: {}]
  %s4 = inlined_call_operand.hbm [shape: f32[1,128], index: 4, kind: input, shape index: {}]
  %s5 = inlined_call_operand.hbm [shape: bf16[128,128], index: 5, kind: input, shape index: {}]
  %s6 = inlined_call_operand.hbm [shape: f32[1,128], index: 6, kind: input, shape index: {}]
  %s7 = inlined_call_operand.vmem [shape: f32[32,128], index: 7, kind: output, shape index: {0}]
  %s8 = inlined_call_operand.vmem [shape: bf16[32,128], index: 8, kind: output, shape index: {1}]
  %9 = xla_tuple %s7, %s8
  %s10 = sld [smem:[#allocation0]]
  $region120: #{vae_forward.2} parent=0
    _
  %s12 = ssub.s32 1, %s10
  %s13 = scalar_select 0, %s12, %s10
  $region1: #{vae_forward.2} parent=0
    #allocation4 [shape = 'u8[98304]{0}', space=vmem, size = 0x18000, scoped, tag = 'input window, operand 0']
    #allocation5 [shape = 'u8[512]{0}', space=vmem, size = 0x400, scoped, tag = 'input window, operand 2, single buffered']
    #allocation6 [shape = 's32[2]{0}', space=sflag, size = 0x8, scoped, tag = 'scoped memory for vae_forward.2']
    #allocation7 [shape = 'u8[32768]{0}', space=vmem, size = 0x8000, scoped, tag = 'input window, operand 3, single buffered']
    #allocation8 [shape = 's32[1]{0}', space=sflag, size = 0x4, scoped, tag = 'scoped memory for vae_forward.2']
    #allocation9 [shape = 'u8[512]{0}', space=vmem, size = 0x400, scoped, tag = 'input window, operand 4, single buffered']
    #allocation10 [shape = 'u8[32768]{0}', space=vmem, size = 0x8000, scoped, tag = 'input window, operand 5, single buffered']
    #allocation11 [shape = 's32[1]{0}', space=sflag, size = 0x4, scoped, tag = 'scoped memory for vae_forward.2']
    #allocation12 [shape = 'u8[512]{0}', space=vmem, size = 0x400, scoped, tag = 'input window, operand 6, single buffered']
    %14 = vsyncpa [#allocation6], 0
    %15 = vsyncpa [#allocation8], 0
    %16 = vsyncpa [#allocation11], 0
    loop: start=0, step=1, limit=4
    $region2: #{vae_forward.2} parent=1 // loop_pre_header
      _
    $region3: #{vae_forward.2} parent=1 // loop_header
      %s18 = sphi 0, %s22
      %p19 = scmp.ge.s32.totalorder %s18, 4
      %s25 = sphi 0, %s37
      %s26 = sphi 0, %s33
      %s27 = sphi 0, %s25
      %s28 = sphi 0, %s26
      %s29 = sphi 0, %s27
      %s30 = sphi 0, %s28
      %s42 = sphi 0, %s44
      %s45 = sphi 0, %s42
      %s46 = sphi 0, %s45
      %s62 = sphi 0, %s46
      %s68 = sphi 0, %s70
      %s71 = sphi 0, %s68
      %s72 = sphi 0, %s71
      %s88 = sphi 0, %s72
      %s92 = sphi 0, %s92
      %s94 = sphi 0, %s92
      %s95 = sphi 0, %s94
      %s109 = sphi 0, %s95
      %s113 = sphi 0, %s113
      %s115 = sphi 0, %s113
      %s116 = sphi 0, %s115
      %s130 = sphi 0, %s116
      %s134 = sphi 0, %s134
      %s136 = sphi 0, %s134
      %s137 = sphi 0, %s136
      %s151 = sphi 0, %s137
      %s155 = sphi 0, %s155
      %s157 = sphi 0, %s155
      %s158 = sphi 0, %s157
      %s172 = sphi 0, %s158
      %s176 = sphi 0, %s176
      %s178 = sphi 0, %s176
      %s179 = sphi 0, %s178
      %s193 = sphi 0, %s179
      %s199 = sphi 0, %s201
      %s202 = sphi 0, %s199
      %s203 = sphi 0, %s202
      %s219 = sphi 0, %s203
      %s225 = sphi 0, %s227
      %s228 = sphi 0, %s225
      %s229 = sphi 0, %s228
      %s245 = sphi 0, %s229
    $region4: #{vae_forward.2} parent=1 // loop_header_branch
      %21 = sbr.rel (%p19) target = $region8
    $region5: #{vae_forward.2} parent=1 // loop_body
      %s23 = ssub.s32 %s18, 1
      %s24 = ssub.s32 %s18, 2
      %s31 = sadd.s32 1, %s26
      %p32 = scmp.ge.s32.totalorder %s31, 2
      %s33 = scalar_select %p32, 0, %s31
      %s34 = sadd.s32 1, %s25
      %s35 = scalar_select %p32, %s34, %s25
      %p36 = scmp.ge.s32.totalorder %s35, 1
      %s37 = scalar_select %p36, 0, %s35
      %s38 = ssub.s32 %s25, %s37
      %s39 = ssub.s32 %s26, %s33
      %s40 = sor.u32 %s38, %s39
      %p41 = scmp.eq.s32.totalorder %s40, 0
      %s43 = sadd.s32 %s42, 1
      %s44 = scalar_select %p41, %s42, %s43
      %p47 = pneg %p41
      %p48 = scmp.eq.s32.totalorder %s18, 1
      %p49 = por %p47, %p48
      %p50 = scmp.ne.s32.totalorder %s42, %s45
      %p51 = scmp.eq.s32.totalorder %s18, 0
      %p52 = por %p50, %p51
      %p53 = scmp.ne.s32.totalorder %s42, %s45
      %p54 = scmp.eq.s32.totalorder %s23, 1
      %p55 = por %p53, %p54
      %p56 = scmp.ne.s32.totalorder %s45, %s46
      %p57 = scmp.eq.s32.totalorder %s23, 0
      %p58 = por %p56, %p57
      %p59 = scmp.ne.s32.totalorder %s45, %s46
      %p60 = scmp.eq.s32.totalorder %s24, 1
      %p61 = por %p59, %p60
      %p63 = scmp.ne.s32.totalorder %s46, %s62
      %p64 = scmp.eq.s32.totalorder %s24, 0
      %p65 = por %p63, %p64
      %s66 = ssub.s32 %s26, %s33
      %p67 = scmp.eq.s32.totalorder %s66, 0
      %s69 = sadd.s32 %s68, 1
      %s70 = scalar_select %p67, %s68, %s69
      %p73 = pneg %p67
      %p74 = scmp.eq.s32.totalorder %s18, 1
      %p75 = por %p73, %p74
      %p76 = scmp.ne.s32.totalorder %s68, %s71
      %p77 = scmp.eq.s32.totalorder %s18, 0
      %p78 = por %p76, %p77
      %p79 = scmp.ne.s32.totalorder %s68, %s71
      %p80 = scmp.eq.s32.totalorder %s23, 1
      %p81 = por %p79, %p80
      %p82 = scmp.ne.s32.totalorder %s71, %s72
      %p83 = scmp.eq.s32.totalorder %s23, 0
      %p84 = por %p82, %p83
      %p85 = scmp.ne.s32.totalorder %s71, %s72
      %p86 = scmp.eq.s32.totalorder %s24, 1
      %p87 = por %p85, %p86
      %p89 = scmp.ne.s32.totalorder %s72, %s88
      %p90 = scmp.eq.s32.totalorder %s24, 0
      %p91 = por %p89, %p90
      %s93 = sadd.s32 %s92, 1
      %p96 = scmp.eq.s32.totalorder %s18, 1
      %p97 = scmp.ne.s32.totalorder %s92, %s94
      %p98 = scmp.eq.s32.totalorder %s18, 0
      %p99 = por %p97, %p98
      %p100 = scmp.ne.s32.totalorder %s92, %s94
      %p101 = scmp.eq.s32.totalorder %s23, 1
      %p102 = por %p100, %p101
      %p103 = scmp.ne.s32.totalorder %s94, %s95
      %p104 = scmp.eq.s32.totalorder %s23, 0
      %p105 = por %p103, %p104
      %p106 = scmp.ne.s32.totalorder %s94, %s95
      %p107 = scmp.eq.s32.totalorder %s24, 1
      %p108 = por %p106, %p107
      %p110 = scmp.ne.s32.totalorder %s95, %s109
      %p111 = scmp.eq.s32.totalorder %s24, 0
      %p112 = por %p110, %p111
      %s114 = sadd.s32 %s113, 1
      %p117 = scmp.eq.s32.totalorder %s18, 1
      %p118 = scmp.ne.s32.totalorder %s113, %s115
      %p119 = scmp.eq.s32.totalorder %s18, 0
      %p120 = por %p118, %p119
      %p121 = scmp.ne.s32.totalorder %s113, %s115
      %p122 = scmp.eq.s32.totalorder %s23, 1
      %p123 = por %p121, %p122
      %p124 = scmp.ne.s32.totalorder %s115, %s116
      %p125 = scmp.eq.s32.totalorder %s23, 0
      %p126 = por %p124, %p125
      %p127 = scmp.ne.s32.totalorder %s115, %s116
      %p128 = scmp.eq.s32.totalorder %s24, 1
      %p129 = por %p127, %p128
      %p131 = scmp.ne.s32.totalorder %s116, %s130
      %p132 = scmp.eq.s32.totalorder %s24, 0
      %p133 = por %p131, %p132
      %s135 = sadd.s32 %s134, 1
      %p138 = scmp.eq.s32.totalorder %s18, 1
      %p139 = scmp.ne.s32.totalorder %s134, %s136
      %p140 = scmp.eq.s32.totalorder %s18, 0
      %p141 = por %p139, %p140
      %p142 = scmp.ne.s32.totalorder %s134, %s136
      %p143 = scmp.eq.s32.totalorder %s23, 1
      %p144 = por %p142, %p143
      %p145 = scmp.ne.s32.totalorder %s136, %s137
      %p146 = scmp.eq.s32.totalorder %s23, 0
      %p147 = por %p145, %p146
      %p148 = scmp.ne.s32.totalorder %s136, %s137
      %p149 = scmp.eq.s32.totalorder %s24, 1
      %p150 = por %p148, %p149
      %p152 = scmp.ne.s32.totalorder %s137, %s151
      %p153 = scmp.eq.s32.totalorder %s24, 0
      %p154 = por %p152, %p153
      %s156 = sadd.s32 %s155, 1
      %p159 = scmp.eq.s32.totalorder %s18, 1
      %p160 = scmp.ne.s32.totalorder %s155, %s157
      %p161 = scmp.eq.s32.totalorder %s18, 0
      %p162 = por %p160, %p161
      %p163 = scmp.ne.s32.totalorder %s155, %s157
      %p164 = scmp.eq.s32.totalorder %s23, 1
      %p165 = por %p163, %p164
      %p166 = scmp.ne.s32.totalorder %s157, %s158
      %p167 = scmp.eq.s32.totalorder %s23, 0
      %p168 = por %p166, %p167
      %p169 = scmp.ne.s32.totalorder %s157, %s158
      %p170 = scmp.eq.s32.totalorder %s24, 1
      %p171 = por %p169, %p170
      %p173 = scmp.ne.s32.totalorder %s158, %s172
      %p174 = scmp.eq.s32.totalorder %s24, 0
      %p175 = por %p173, %p174
      %s177 = sadd.s32 %s176, 1
      %p180 = scmp.eq.s32.totalorder %s18, 1
      %p181 = scmp.ne.s32.totalorder %s176, %s178
      %p182 = scmp.eq.s32.totalorder %s18, 0
      %p183 = por %p181, %p182
      %p184 = scmp.ne.s32.totalorder %s176, %s178
      %p185 = scmp.eq.s32.totalorder %s23, 1
      %p186 = por %p184, %p185
      %p187 = scmp.ne.s32.totalorder %s178, %s179
      %p188 = scmp.eq.s32.totalorder %s23, 0
      %p189 = por %p187, %p188
      %p190 = scmp.ne.s32.totalorder %s178, %s179
      %p191 = scmp.eq.s32.totalorder %s24, 1
      %p192 = por %p190, %p191
      %p194 = scmp.ne.s32.totalorder %s179, %s193
      %p195 = scmp.eq.s32.totalorder %s24, 0
      %p196 = por %p194, %p195
      %s197 = ssub.s32 %s25, %s37
      %p198 = scmp.eq.s32.totalorder %s197, 0
      %s200 = sadd.s32 %s199, 1
      %s201 = scalar_select %p198, %s199, %s200
      %p204 = pneg %p198
      %p205 = scmp.eq.s32.totalorder %s18, 1
      %p206 = por %p204, %p205
      %p207 = scmp.ne.s32.totalorder %s199, %s202
      %p208 = scmp.eq.s32.totalorder %s18, 0
      %p209 = por %p207, %p208
      %p210 = scmp.ne.s32.totalorder %s199, %s202
      %p211 = scmp.eq.s32.totalorder %s23, 1
      %p212 = por %p210, %p211
      %p213 = scmp.ne.s32.totalorder %s202, %s203
      %p214 = scmp.eq.s32.totalorder %s23, 0
      %p215 = por %p213, %p214
      %p216 = scmp.ne.s32.totalorder %s202, %s203
      %p217 = scmp.eq.s32.totalorder %s24, 1
      %p218 = por %p216, %p217
      %p220 = scmp.ne.s32.totalorder %s203, %s219
      %p221 = scmp.eq.s32.totalorder %s24, 0
      %p222 = por %p220, %p221
      %s223 = ssub.s32 %s25, %s37
      %p224 = scmp.eq.s32.totalorder %s223, 0
      %s226 = sadd.s32 %s225, 1
      %s227 = scalar_select %p224, %s225, %s226
      %p230 = pneg %p224
      %p231 = scmp.eq.s32.totalorder %s18, 1
      %p232 = por %p230, %p231
      %p233 = scmp.ne.s32.totalorder %s225, %s228
      %p234 = scmp.eq.s32.totalorder %s18, 0
      %p235 = por %p233, %p234
      %p236 = scmp.ne.s32.totalorder %s225, %s228
      %p237 = scmp.eq.s32.totalorder %s23, 1
      %p238 = por %p236, %p237
      %p239 = scmp.ne.s32.totalorder %s228, %s229
      %p240 = scmp.eq.s32.totalorder %s23, 0
      %p241 = por %p239, %p240
      %p242 = scmp.ne.s32.totalorder %s228, %s229
      %p243 = scmp.eq.s32.totalorder %s24, 1
      %p244 = por %p242, %p243
      %p246 = scmp.ne.s32.totalorder %s229, %s245
      %p247 = scmp.eq.s32.totalorder %s24, 0
      %p248 = por %p246, %p247
      %p249 = scmp.le.s32.totalorder 1, %s18
      %p250 = scmp.lt.s32.totalorder %s18, 3
      %p251 = pnand %p249, %p250
      %p252 = pneg %p251
      // Predicated region
      $region9: #{vae_forward.2} parent=5 // pred_check
        _
      $region10: #{vae_forward.2} parent=5 // pred_check_branch
        %254 = sbr.rel (%p251) target = $region12
      $region11: #{vae_forward.2} parent=5 // pred_region
        %s255 = ssub.s32 %s18, 1
        // Predicated region
        $region13: #{vae_forward.2} parent=11 // pred_check
          %p256 = pneg %p105
        $region14: #{vae_forward.2} parent=11 // pred_check_branch
          %258 = sbr.rel (%p256) target = $region16
        $region15: #{vae_forward.2} parent=11 // pred_region
          %s260 = ssub.s32 16, 16
          %261 = vsyncadd [#allocation6], %s260
          %s263 = sshll.u32 [#allocation5], 4
          %s264 = int_to_ptr.vmem [resolvable:$true] %s263
          %266 = dma.hbm_to_vmem [thread:$0]  %s2, 16, %s264, [#allocation6]
        $region16: #{vae_forward.2} parent=11 // pred_fallthru
          _
        // Predicated region
        $region17: #{vae_forward.2} parent=11 // pred_check
          %p267 = pneg %p126
        $region18: #{vae_forward.2} parent=11 // pred_check_branch
          %269 = sbr.rel (%p267) target = $region20
        $region19: #{vae_forward.2} parent=11 // pred_region
          %s271 = ssub.s32 1024, 1024
          %272 = vsyncadd [#allocation8], %s271
          %s273 = sshll.u32 [#allocation7], 4
          %s274 = int_to_ptr.vmem [resolvable:$true] %s273
          %279 = dma.hbm_to_vmem [thread:$0]  %s3, 1024, %s274, [#allocation8], 64, 64, 4
        $region20: #{vae_forward.2} parent=11 // pred_fallthru
          _
        // Predicated region
        $region21: #{vae_forward.2} parent=11 // pred_check
          %p280 = pneg %p147
        $region22: #{vae_forward.2} parent=11 // pred_check_branch
          %282 = sbr.rel (%p280) target = $region24
        $region23: #{vae_forward.2} parent=11 // pred_region
          %s284 = ssub.s32 16, 16
          %285 = vsyncadd [#allocation8], %s284
          %s287 = sshll.u32 [#allocation9], 4
          %s288 = int_to_ptr.vmem [resolvable:$true] %s287
          %290 = dma.hbm_to_vmem [thread:$0]  %s4, 16, %s288, [#allocation8]
        $region24: #{vae_forward.2} parent=11 // pred_fallthru
          _
        // Predicated region
        $region25: #{vae_forward.2} parent=11 // pred_check
          %p291 = pneg %p168
        $region26: #{vae_forward.2} parent=11 // pred_check_branch
          %293 = sbr.rel (%p291) target = $region28
        $region27: #{vae_forward.2} parent=11 // pred_region
          %s295 = ssub.s32 1024, 1024
          %296 = vsyncadd [#allocation11], %s295
          %s297 = sshll.u32 [#allocation10], 4
          %s298 = int_to_ptr.vmem [resolvable:$true] %s297
          %303 = dma.hbm_to_vmem [thread:$0]  %s5, 1024, %s298, [#allocation11], 64, 64, 4
        $region28: #{vae_forward.2} parent=11 // pred_fallthru
          _
        // Predicated region
        $region29: #{vae_forward.2} parent=11 // pred_check
          %p304 = pneg %p189
        $region30: #{vae_forward.2} parent=11 // pred_check_branch
          %306 = sbr.rel (%p304) target = $region32
        $region31: #{vae_forward.2} parent=11 // pred_region
          %s308 = ssub.s32 16, 16
          %309 = vsyncadd [#allocation11], %s308
          %s311 = sshll.u32 [#allocation12], 4
          %s312 = int_to_ptr.vmem [resolvable:$true] %s311
          %314 = dma.hbm_to_vmem [thread:$0]  %s6, 16, %s312, [#allocation11]
        $region32: #{vae_forward.2} parent=11 // pred_fallthru
          _
      $region12: #{vae_forward.2} parent=5 // pred_fallthru
        _
      %p315 = scmp.lt.s32.totalorder %s18, 2
      // Predicated region
      $region33: #{vae_forward.2} parent=5 // pred_check
        %p316 = pneg %p315
      $region34: #{vae_forward.2} parent=5 // pred_check_branch
        %318 = sbr.rel (%p316) target = $region36
      $region35: #{vae_forward.2} parent=5 // pred_region
        // Predicated region
        $region37: #{vae_forward.2} parent=35 // pred_check
          %p319 = pneg %p52
        $region38: #{vae_forward.2} parent=35 // pred_check_branch
          %321 = sbr.rel (%p319) target = $region40
        $region39: #{vae_forward.2} parent=35 // pred_region
          %s322 = sand.u32 %s42, 1
          %s323 = sand.u32 %s42, 1
          %s324 = smul.addr %s323, 96
          %s325 = scalar_lea.vmem [#allocation4], %s324
          %s326 = smul.u32 4, %s25
          %s327 = smul.u32 6, %s26
          %s328 = smul.addr %s326, 12
          %s329 = sadd.s32 %s327, %s328
          %s330 = smul.addr %s329, 4
          %s331 = scalar_lea.vmem %s0, %s330
          // Predicated region
          $region41: #{vae_forward.2} parent=39 // pred_check
            _
          $region42: #{vae_forward.2} parent=39 // pred_check_branch
            %333 = sbr.rel (0) target = $region44
          $region43: #{vae_forward.2} parent=39 // pred_region
            // Predicated region
            $region45: #{vae_forward.2} parent=43 // pred_check
              _
            $region46: #{vae_forward.2} parent=43 // pred_check_branch
              %335 = sbr.rel (0) target = $region48
            $region47: #{vae_forward.2} parent=43 // pred_region
              loop: start=0, step=1, limit=1
              $region49: #{vae_forward.2} parent=47 // loop_pre_header
                _
              $region50: #{vae_forward.2} parent=47 // loop_header
                %s337 = sphi 0, %s341
                %p338 = scmp.ge.s32.totalorder %s337, 1
                %s342 = sphi %s331, %s331
                %s343 = sphi %s325, %s325
              $region51: #{vae_forward.2} parent=47 // loop_header_branch
                %340 = sbr.rel (%p338) target = $region55
              $region52: #{vae_forward.2} parent=47 // loop_body
                %v344 = vld [vmem:[%s342] sm:$0xff]
                %345 = vst [vmem:[%s343] sm:$0xff] %v344
                %v346 = vld [vmem:[%s342 + $0x8] sm:$0xff]
                %347 = vst [vmem:[%s343 + $0x8] sm:$0xff] %v346
                %v348 = vld [vmem:[%s342 + $0x10] sm:$0xff]
                %349 = vst [vmem:[%s343 + $0x10] sm:$0xff] %v348
                %v350 = vld [vmem:[%s342 + $0x30] sm:$0xff]
                %351 = vst [vmem:[%s343 + $0x18] sm:$0xff] %v350
                %v352 = vld [vmem:[%s342 + $0x38] sm:$0xff]
                %353 = vst [vmem:[%s343 + $0x20] sm:$0xff] %v352
                %v354 = vld [vmem:[%s342 + $0x40] sm:$0xff]
                %355 = vst [vmem:[%s343 + $0x28] sm:$0xff] %v354
                %v356 = vld [vmem:[%s342 + $0x60] sm:$0xff]
                %357 = vst [vmem:[%s343 + $0x30] sm:$0xff] %v356
                %v358 = vld [vmem:[%s342 + $0x68] sm:$0xff]
                %359 = vst [vmem:[%s343 + $0x38] sm:$0xff] %v358
                %v360 = vld [vmem:[%s342 + $0x70] sm:$0xff]
                %361 = vst [vmem:[%s343 + $0x40] sm:$0xff] %v360
                %v362 = vld [vmem:[%s342 + $0x90] sm:$0xff]
                %363 = vst [vmem:[%s343 + $0x48] sm:$0xff] %v362
                %v364 = vld [vmem:[%s342 + $0x98] sm:$0xff]
                %365 = vst [vmem:[%s343 + $0x50] sm:$0xff] %v364
                %v366 = vld [vmem:[%s342 + $0xa0] sm:$0xff]
                %367 = vst [vmem:[%s343 + $0x58] sm:$0xff] %v366
              $region53: #{vae_forward.2} parent=47 // loop_footer
                %s341 = sadd.s32 1, %s337
              $region54: #{vae_forward.2} parent=47 // loop_footer_branch
                %336 = sbr.rel target = $region50
              $region55: #{vae_forward.2} parent=47 // loop_exit
                _
            $region48: #{vae_forward.2} parent=43 // pred_fallthru
              _
            // Predicated region
            $region56: #{vae_forward.2} parent=43 // pred_check
              _
            $region57: #{vae_forward.2} parent=43 // pred_check_branch
              %369 = sbr.rel target = $region59
            $region58: #{vae_forward.2} parent=43 // pred_region
              _
            $region59: #{vae_forward.2} parent=43 // pred_fallthru
              _
          $region44: #{vae_forward.2} parent=39 // pred_fallthru
            _
          %370 = vnop
        $region40: #{vae_forward.2} parent=35 // pred_fallthru
          _
        // Predicated region
        $region60: #{vae_forward.2} parent=35 // pred_check
          %p371 = pneg %p78
        $region61: #{vae_forward.2} parent=35 // pred_check_branch
          %373 = sbr.rel (%p371) target = $region63
        $region62: #{vae_forward.2} parent=35 // pred_region
          %s374 = smul.u32 96, %s26
          %p375 = scmp.lt.s32.totalorder %s374, 191
          %s376 = scalar_select %p375, %s374, 191
          %s377 = smul.addr %s376, 4
          %s378 = scalar_lea.vmem %s1, %s377
          %s379 = smul.u32 96, %s26
        $region63: #{vae_forward.2} parent=35 // pred_fallthru
          _
      $region36: #{vae_forward.2} parent=5 // pred_fallthru
        _
      %p380 = scmp.le.s32.totalorder 1, %s18
      %p381 = scmp.lt.s32.totalorder %s18, 3
      %p382 = pnand %p380, %p381
      %p383 = pneg %p382
      // Predicated region
      $region64: #{vae_forward.2} parent=5 // pred_check
        _
      $region65: #{vae_forward.2} parent=5 // pred_check_branch
        %385 = sbr.rel (%p382) target = $region67
      $region66: #{vae_forward.2} parent=5 // pred_region
        %s386 = ssub.s32 %s18, 1
        %s387 = sand.u32 %s45, 1
        %s388 = sand.u32 %s45, 1
        %s389 = smul.addr %s388, 96
        %s390 = scalar_lea.vmem [#allocation4], %s389
        // Predicated region
        $region68: #{vae_forward.2} parent=66 // pred_check
          %p391 = pneg %p58
        $region69: #{vae_forward.2} parent=66 // pred_check_branch
          %393 = sbr.rel (%p391) target = $region71
        $region70: #{vae_forward.2} parent=66 // pred_region
          _
        $region71: #{vae_forward.2} parent=66 // pred_fallthru
          _
        // Predicated region
        $region72: #{vae_forward.2} parent=66 // pred_check
          %p394 = pneg %p105
        $region73: #{vae_forward.2} parent=66 // pred_check_branch
          %396 = sbr.rel (%p394) target = $region75
        $region74: #{vae_forward.2} parent=66 // pred_region
          %397 = dma.done [#allocation6], 16
        $region75: #{vae_forward.2} parent=66 // pred_fallthru
          _
        // Predicated region
        $region76: #{vae_forward.2} parent=66 // pred_check
          %p398 = pneg %p126
        $region77: #{vae_forward.2} parent=66 // pred_check_branch
          %400 = sbr.rel (%p398) target = $region79
        $region78: #{vae_forward.2} parent=66 // pred_region
          %401 = dma.done [#allocation8], 1024
        $region79: #{vae_forward.2} parent=66 // pred_fallthru
          _
        // Predicated region
        $region80: #{vae_forward.2} parent=66 // pred_check
          %p402 = pneg %p147
        $region81: #{vae_forward.2} parent=66 // pred_check_branch
          %404 = sbr.rel (%p402) target = $region83
        $region82: #{vae_forward.2} parent=66 // pred_region
          %405 = dma.done [#allocation8], 16
        $region83: #{vae_forward.2} parent=66 // pred_fallthru
          _
        // Predicated region
        $region84: #{vae_forward.2} parent=66 // pred_check
          %p406 = pneg %p168
        $region85: #{vae_forward.2} parent=66 // pred_check_branch
          %408 = sbr.rel (%p406) target = $region87
        $region86: #{vae_forward.2} parent=66 // pred_region
          %409 = dma.done [#allocation11], 1024
        $region87: #{vae_forward.2} parent=66 // pred_fallthru
          _
        // Predicated region
        $region88: #{vae_forward.2} parent=66 // pred_check
          %p410 = pneg %p189
        $region89: #{vae_forward.2} parent=66 // pred_check_branch
          %412 = sbr.rel (%p410) target = $region91
        $region90: #{vae_forward.2} parent=66 // pred_region
          %413 = dma.done [#allocation11], 16
        $region91: #{vae_forward.2} parent=66 // pred_fallthru
          _
        %s414 = sand.u32 %s45, 1
        %s415 = sand.u32 %s45, 1
        %s416 = smul.addr %s415, 96
        %s417 = scalar_lea.vmem [#allocation4], %s416
        %p418 = pneg %p58
        %p419 = pneg %p55
        %s420 = smul.u32 96, %s28
        %p421 = scmp.lt.s32.totalorder %s420, 191
        %s422 = scalar_select %p421, %s420, 191
        %s423 = smul.addr %s422, 4
        %s424 = scalar_lea.vmem %s1, %s423
        %p425 = pneg %p84
        %p426 = pneg %p81
        %p427 = pneg %p105
        %p428 = pneg %p102
        %p429 = pneg %p126
        %p430 = pneg %p123
        %p431 = pneg %p147
        %p432 = pneg %p144
        %p433 = pneg %p168
        %p434 = pneg %p165
        %p435 = pneg %p189
        %p436 = pneg %p186
        %p437 = pneg %p215
        %p438 = pneg %p212
        %s439 = smul.u32 4, %s27
        %p440 = scmp.lt.s32.totalorder %s439, 3
        %s441 = scalar_select %p440, %s439, 3
        %s442 = smul.addr %s441, 8
        %s443 = scalar_lea.vmem %s7, %s442
        %p444 = pneg %p241
        %p445 = pneg %p238
        %s446 = smul.u32 4, %s27
        %p447 = scmp.lt.s32.totalorder %s446, 3
        %s448 = scalar_select %p447, %s446, 3
        %s449 = smul.addr %s448, 4
        %s450 = scalar_lea.vmem %s8, %s449
        %s451 = smul.u32 4, %s27
        %s452 = smul.u32 6, %s28
        %s453 = smul.u32 96, %s28
        %p454 = scmp.lt.s32.totalorder %s453, 191
        %s455 = scalar_select %p454, %s453, 191
        %s456 = smul.addr %s455, 4
        %s457 = scalar_lea.vmem %s1, %s456
        %s458 = smul.u32 96, %s28
        %s459 = smul.u32 4, %s27
        %p460 = scmp.lt.s32.totalorder %s459, 3
        %s461 = scalar_select %p460, %s459, 3
        %s462 = smul.addr %s461, 8
        %s463 = scalar_lea.vmem %s7, %s462
        %s464 = smul.u32 4, %s27
        %s465 = smul.u32 4, %s27
        %p466 = scmp.lt.s32.totalorder %s465, 3
        %s467 = scalar_select %p466, %s465, 3
        %s468 = smul.addr %s467, 4
        %s469 = scalar_lea.vmem %s8, %s468
        %s470 = smul.u32 4, %s27
        %p472 = scmp.eq.s32.totalorder %s28, 0
        // Predicated region
        $region92: #{vae_forward.2} parent=66 // pred_check
          %p473 = pneg %p472
        $region93: #{vae_forward.2} parent=66 // pred_check_branch
          %475 = sbr.rel (%p473) target = $region95
        $region94: #{vae_forward.2} parent=66 // pred_region
          %476 = vst [vmem:[#allocation2] sm:$0xff] 0.0
          %477 = vst [vmem:[#allocation2 + $0x8] sm:$0xff] 0.0
          %478 = vst [vmem:[#allocation2 + $0x10] sm:$0xff] 0.0
          %479 = vst [vmem:[#allocation2 + $0x18] sm:$0xff] 0.0
          %vm480 = vcmask 7168
          %481 = vst.msk [vmem:[#allocation3] sm:$0xff] %vm480, 0.0
          %482 = vst.msk [vmem:[#allocation3 + $0x8] sm:$0xff] %vm480, 0.0
          %483 = vst.msk [vmem:[#allocation3 + $0x10] sm:$0xff] %vm480, 0.0
          %484 = vst.msk [vmem:[#allocation3 + $0x18] sm:$0xff] %vm480, 0.0
        $region95: #{vae_forward.2} parent=66 // pred_fallthru
          _
        %v485 = vld [vmem:[%s390] sm:$0xff]
        %v486 = vld [vmem:[%s390 + $0x8] sm:$0xff]
        %v487 = vld [vmem:[%s390 + $0x10] sm:$0xff]
        %v488 = vld [vmem:[%s390 + $0x18] sm:$0xff]
        %v489 = vld [vmem:[%s390 + $0x20] sm:$0xff]
        %v490 = vld [vmem:[%s390 + $0x28] sm:$0xff]
        %v491 = vld [vmem:[%s390 + $0x30] sm:$0xff]
        %v492 = vld [vmem:[%s390 + $0x38] sm:$0xff]
        %v493 = vld [vmem:[%s390 + $0x40] sm:$0xff]
        %v494 = vld [vmem:[%s390 + $0x48] sm:$0xff]
        %v495 = vld [vmem:[%s390 + $0x50] sm:$0xff]
        %v496 = vld [vmem:[%s390 + $0x58] sm:$0xff]
        %v497 = vunpack.c.l.bf16 %v485
        %v498 = vunpack.c.h.bf16 %v485
        %v499 = vunpack.c.l.bf16 %v486
        %v500 = vunpack.c.h.bf16 %v486
        %v501 = vunpack.c.l.bf16 %v487
        %v502 = vunpack.c.h.bf16 %v487
        %v503 = vunpack.c.l.bf16 %v488
        %v504 = vunpack.c.h.bf16 %v488
        %v505 = vunpack.c.l.bf16 %v489
        %v506 = vunpack.c.h.bf16 %v489
        %v507 = vunpack.c.l.bf16 %v490
        %v508 = vunpack.c.h.bf16 %v490
        %v509 = vunpack.c.l.bf16 %v491
        %v510 = vunpack.c.h.bf16 %v491
        %v511 = vunpack.c.l.bf16 %v492
        %v512 = vunpack.c.h.bf16 %v492
        %v513 = vunpack.c.l.bf16 %v493
        %v514 = vunpack.c.h.bf16 %v493
        %v515 = vunpack.c.l.bf16 %v494
        %v516 = vunpack.c.h.bf16 %v494
        %v517 = vunpack.c.l.bf16 %v495
        %v518 = vunpack.c.h.bf16 %v495
        %v519 = vunpack.c.l.bf16 %v496
        %v520 = vunpack.c.h.bf16 %v496
        %v521 = vld [vmem:[#allocation3] sm:$0xff]
        %v522 = vld [vmem:[#allocation3 + $0x8] sm:$0xff]
        %v523 = vld [vmem:[#allocation3 + $0x10] sm:$0xff]
        %v524 = vld [vmem:[#allocation3 + $0x18] sm:$0xff]
        %v525 = vmul.f32 %v497, %v497
        %v526 = vmul.f32 %v498, %v498
        %v527 = vmul.f32 %v499, %v499
        %v528 = vmul.f32 %v500, %v500
        %v529 = vmul.f32 %v501, %v501
        %v530 = vmul.f32 %v502, %v502
        %v531 = vmul.f32 %v503, %v503
        %v532 = vmul.f32 %v504, %v504
        %v533 = vmul.f32 %v505, %v505
        %v534 = vmul.f32 %v506, %v506
        %v535 = vmul.f32 %v507, %v507
        %v536 = vmul.f32 %v508, %v508
        %v537 = vmul.f32 %v509, %v509
        %v538 = vmul.f32 %v510, %v510
        %v539 = vmul.f32 %v511, %v511
        %v540 = vmul.f32 %v512, %v512
        %v541 = vmul.f32 %v513, %v513
        %v542 = vmul.f32 %v514, %v514
        %v543 = vmul.f32 %v515, %v515
        %v544 = vmul.f32 %v516, %v516
        %v545 = vmul.f32 %v517, %v517
        %v546 = vmul.f32 %v518, %v518
        %v547 = vmul.f32 %v519, %v519
        %v548 = vmul.f32 %v520, %v520
        %v549 = vadd.f32 %v525, %v526
        %v550 = vadd.f32 %v549, %v527
        %v551 = vadd.f32 %v550, %v528
        %v552 = vadd.f32 %v551, %v529
        %v553 = vadd.f32 %v552, %v530
        %554 = vadd.xlane.f32.xlu0 %v553
        %v555 = vpop.xlane.xlu0 %554
        %v556 = vadd.f32 %v531, %v532
        %v557 = vadd.f32 %v556, %v533
        %v558 = vadd.f32 %v557, %v534
        %v559 = vadd.f32 %v558, %v535
        %v560 = vadd.f32 %v559, %v536
        %561 = vadd.xlane.f32.xlu0 %v560
        %v562 = vpop.xlane.xlu0 %561
        %v563 = vadd.f32 %v537, %v538
        %v564 = vadd.f32 %v563, %v539
        %v565 = vadd.f32 %v564, %v540
        %v566 = vadd.f32 %v565, %v541
        %v567 = vadd.f32 %v566, %v542
        %568 = vadd.xlane.f32.xlu0 %v567
        %v569 = vpop.xlane.xlu0 %568
        %v570 = vadd.f32 %v543, %v544
        %v571 = vadd.f32 %v570, %v545
        %v572 = vadd.f32 %v571, %v546
        %v573 = vadd.f32 %v572, %v547
        %v574 = vadd.f32 %v573, %v548
        %575 = vadd.xlane.f32.xlu0 %v574
        %v576 = vpop.xlane.xlu0 %575
        %v577 = vadd.f32 %v521, %v555
        %v578 = vadd.f32 %v522, %v562
        %v579 = vadd.f32 %v523, %v569
        %v580 = vadd.f32 %v524, %v576
        %vm581 = vcmask 7168
        %582 = vst.msk [vmem:[#allocation3] sm:$0xff] %vm581, %v577
        %583 = vst.msk [vmem:[#allocation3 + $0x8] sm:$0xff] %vm581, %v578
        %584 = vst.msk [vmem:[#allocation3 + $0x10] sm:$0xff] %vm581, %v579
        %585 = vst.msk [vmem:[#allocation3 + $0x18] sm:$0xff] %vm581, %v580
        %v586 = vld [vmem:[#allocation2] sm:$0xff]
        %v587 = vld [vmem:[#allocation2 + $0x8] sm:$0xff]
        %v588 = vld [vmem:[#allocation2 + $0x10] sm:$0xff]
        %v589 = vld [vmem:[#allocation2 + $0x18] sm:$0xff]
        %v590 = vld [vmem:[%s457] sm:$0xf]
        %v591 = vld [vmem:[%s457 + $0x4] sm:$0xf]
        %v592 = vld [vmem:[%s457 + $0x8] sm:$0xf]
        %v593 = vld [vmem:[%s457 + $0xc] sm:$0xf]
        %v594 = vld [vmem:[%s457 + $0x10] sm:$0xf]
        %v595 = vld [vmem:[%s457 + $0x14] sm:$0xf]
        %v596 = vld [vmem:[%s457 + $0x18] sm:$0xf]
        %v597 = vld [vmem:[%s457 + $0x1c] sm:$0xf]
        %v598 = vld [vmem:[%s457 + $0x20] sm:$0xf]
        %v599 = vld [vmem:[%s457 + $0x24] sm:$0xf]
        %v600 = vld [vmem:[%s457 + $0x28] sm:$0xf]
        %v601 = vld [vmem:[%s457 + $0x2c] sm:$0xf]
        %v602 = vld [vmem:[%s457 + $0x30] sm:$0xf]
        %v603 = vld [vmem:[%s457 + $0x34] sm:$0xf]
        %v604 = vld [vmem:[%s457 + $0x38] sm:$0xf]
        %v605 = vld [vmem:[%s457 + $0x3c] sm:$0xf]
        %v606 = vld [vmem:[%s457 + $0x40] sm:$0xf]
        %v607 = vld [vmem:[%s457 + $0x44] sm:$0xf]
        %v608 = vld [vmem:[%s457 + $0x48] sm:$0xf]
        %v609 = vld [vmem:[%s457 + $0x4c] sm:$0xf]
        %v610 = vld [vmem:[%s457 + $0x50] sm:$0xf]
        %v611 = vld [vmem:[%s457 + $0x54] sm:$0xf]
        %v612 = vld [vmem:[%s457 + $0x58] sm:$0xf]
        %v613 = vld [vmem:[%s457 + $0x5c] sm:$0xf]
        %v614 = vld [vmem:[%s457 + $0x60] sm:$0xf]
        %v615 = vld [vmem:[%s457 + $0x64] sm:$0xf]
        %v616 = vld [vmem:[%s457 + $0x68] sm:$0xf]
        %v617 = vld [vmem:[%s457 + $0x6c] sm:$0xf]
        %v618 = vld [vmem:[%s457 + $0x70] sm:$0xf]
        %v619 = vld [vmem:[%s457 + $0x74] sm:$0xf]
        %v620 = vld [vmem:[%s457 + $0x78] sm:$0xf]
        %v621 = vld [vmem:[%s457 + $0x7c] sm:$0xf]
        %v622 = vld [vmem:[%s457 + $0x80] sm:$0xf]
        %v623 = vld [vmem:[%s457 + $0x84] sm:$0xf]
        %v624 = vld [vmem:[%s457 + $0x88] sm:$0xf]
        %v625 = vld [vmem:[%s457 + $0x8c] sm:$0xf]
        %v626 = vld [vmem:[%s457 + $0x90] sm:$0xf]
        %v627 = vld [vmem:[%s457 + $0x94] sm:$0xf]
        %v628 = vld [vmem:[%s457 + $0x98] sm:$0xf]
        %v629 = vld [vmem:[%s457 + $0x9c] sm:$0xf]
        %v630 = vld [vmem:[%s457 + $0xa0] sm:$0xf]
        %v631 = vld [vmem:[%s457 + $0xa4] sm:$0xf]
        %v632 = vld [vmem:[%s457 + $0xa8] sm:$0xf]
        %v633 = vld [vmem:[%s457 + $0xac] sm:$0xf]
        %v634 = vld [vmem:[%s457 + $0xb0] sm:$0xf]
        %v635 = vld [vmem:[%s457 + $0xb4] sm:$0xf]
        %v636 = vld [vmem:[%s457 + $0xb8] sm:$0xf]
        %v637 = vld [vmem:[%s457 + $0xbc] sm:$0xf]
        %v638 = vld [vmem:[%s457 + $0xc0] sm:$0xf]
        %v639 = vld [vmem:[%s457 + $0xc4] sm:$0xf]
        %v640 = vld [vmem:[%s457 + $0xc8] sm:$0xf]
        %v641 = vld [vmem:[%s457 + $0xcc] sm:$0xf]
        %v642 = vld [vmem:[%s457 + $0xd0] sm:$0xf]
        %v643 = vld [vmem:[%s457 + $0xd4] sm:$0xf]
        %v644 = vld [vmem:[%s457 + $0xd8] sm:$0xf]
        %v645 = vld [vmem:[%s457 + $0xdc] sm:$0xf]
        %v646 = vld [vmem:[%s457 + $0xe0] sm:$0xf]
        %v647 = vld [vmem:[%s457 + $0xe4] sm:$0xf]
        %v648 = vld [vmem:[%s457 + $0xe8] sm:$0xf]
        %v649 = vld [vmem:[%s457 + $0xec] sm:$0xf]
        %v650 = vld [vmem:[%s457 + $0xf0] sm:$0xf]
        %v651 = vld [vmem:[%s457 + $0xf4] sm:$0xf]
        %v652 = vld [vmem:[%s457 + $0xf8] sm:$0xf]
        %v653 = vld [vmem:[%s457 + $0xfc] sm:$0xf]
        %v654 = vld [vmem:[%s457 + $0x100] sm:$0xf]
        %v655 = vld [vmem:[%s457 + $0x104] sm:$0xf]
        %v656 = vld [vmem:[%s457 + $0x108] sm:$0xf]
        %v657 = vld [vmem:[%s457 + $0x10c] sm:$0xf]
        %v658 = vld [vmem:[%s457 + $0x110] sm:$0xf]
        %v659 = vld [vmem:[%s457 + $0x114] sm:$0xf]
        %v660 = vld [vmem:[%s457 + $0x118] sm:$0xf]
        %v661 = vld [vmem:[%s457 + $0x11c] sm:$0xf]
        %v662 = vld [vmem:[%s457 + $0x120] sm:$0xf]
        %v663 = vld [vmem:[%s457 + $0x124] sm:$0xf]
        %v664 = vld [vmem:[%s457 + $0x128] sm:$0xf]
        %v665 = vld [vmem:[%s457 + $0x12c] sm:$0xf]
        %v666 = vld [vmem:[%s457 + $0x130] sm:$0xf]
        %v667 = vld [vmem:[%s457 + $0x134] sm:$0xf]
        %v668 = vld [vmem:[%s457 + $0x138] sm:$0xf]
        %v669 = vld [vmem:[%s457 + $0x13c] sm:$0xf]
        %v670 = vld [vmem:[%s457 + $0x140] sm:$0xf]
        %v671 = vld [vmem:[%s457 + $0x144] sm:$0xf]
        %v672 = vld [vmem:[%s457 + $0x148] sm:$0xf]
        %v673 = vld [vmem:[%s457 + $0x14c] sm:$0xf]
        %v674 = vld [vmem:[%s457 + $0x150] sm:$0xf]
        %v675 = vld [vmem:[%s457 + $0x154] sm:$0xf]
        %v676 = vld [vmem:[%s457 + $0x158] sm:$0xf]
        %v677 = vld [vmem:[%s457 + $0x15c] sm:$0xf]
        %v678 = vld [vmem:[%s457 + $0x160] sm:$0xf]
        %v679 = vld [vmem:[%s457 + $0x164] sm:$0xf]
        %v680 = vld [vmem:[%s457 + $0x168] sm:$0xf]
        %v681 = vld [vmem:[%s457 + $0x16c] sm:$0xf]
        %v682 = vld [vmem:[%s457 + $0x170] sm:$0xf]
        %v683 = vld [vmem:[%s457 + $0x174] sm:$0xf]
        %v684 = vld [vmem:[%s457 + $0x178] sm:$0xf]
        %v685 = vld [vmem:[%s457 + $0x17c] sm:$0xf]
        %v698 = vunpack.c.l.b16 %v485
        %v699 = vunpack.c.h.b16 %v485
        %v700 = vunpack.c.l.b16 %v486
        %v701 = vunpack.c.h.b16 %v486
        %v702 = vunpack.c.l.b16 %v487
        %v703 = vunpack.c.h.b16 %v487
        %v704 = vunpack.c.l.b16 %v488
        %v705 = vunpack.c.h.b16 %v488
        %v706 = vunpack.c.l.b16 %v489
        %v707 = vunpack.c.h.b16 %v489
        %v708 = vunpack.c.l.b16 %v490
        %v709 = vunpack.c.h.b16 %v490
        %v710 = vunpack.c.l.b16 %v491
        %v711 = vunpack.c.h.b16 %v491
        %v712 = vunpack.c.l.b16 %v492
        %v713 = vunpack.c.h.b16 %v492
        %v714 = vunpack.c.l.b16 %v493
        %v715 = vunpack.c.h.b16 %v493
        %v716 = vunpack.c.l.b16 %v494
        %v717 = vunpack.c.h.b16 %v494
        %v718 = vunpack.c.l.b16 %v495
        %v719 = vunpack.c.h.b16 %v495
        %v720 = vunpack.c.l.b16 %v496
        %v721 = vunpack.c.h.b16 %v496
        %v722 = vpack.c.b16 %v704, %v698
        %v723 = vpack.c.b16 %v705, %v699
        %v724 = vpack.c.b16 %v706, %v700
        %v725 = vpack.c.b16 %v707, %v701
        %v726 = vpack.c.b16 %v708, %v702
        %v727 = vpack.c.b16 %v709, %v703
        %v728 = vpack.c.b16 %v716, %v710
        %v729 = vpack.c.b16 %v717, %v711
        %v730 = vpack.c.b16 %v718, %v712
        %v731 = vpack.c.b16 %v719, %v713
        %v732 = vpack.c.b16 %v720, %v714
        %v733 = vpack.c.b16 %v721, %v715
        %v842 = vunpack.c.l.b16 %v590
        %v843 = vunpack.c.l.b16 %v591
        %v844 = vunpack.c.l.b16 %v592
        %v845 = vunpack.c.l.b16 %v593
        %v846 = vunpack.c.l.b16 %v594
        %v847 = vunpack.c.l.b16 %v595
        %v848 = vunpack.c.l.b16 %v596
        %v849 = vunpack.c.l.b16 %v597
        %v850 = vunpack.c.l.b16 %v598
        %v851 = vunpack.c.l.b16 %v599
        %v852 = vunpack.c.l.b16 %v600
        %v853 = vunpack.c.l.b16 %v601
        %v854 = vunpack.c.l.b16 %v602
        %v855 = vunpack.c.l.b16 %v603
        %v856 = vunpack.c.l.b16 %v604
        %v857 = vunpack.c.l.b16 %v605
        %v858 = vunpack.c.l.b16 %v606
        %v859 = vunpack.c.l.b16 %v607
        %v860 = vunpack.c.l.b16 %v608
        %v861 = vunpack.c.l.b16 %v609
        %v862 = vunpack.c.l.b16 %v610
        %v863 = vunpack.c.l.b16 %v611
        %v864 = vunpack.c.l.b16 %v612
        %v865 = vunpack.c.l.b16 %v613
        %v866 = vunpack.c.l.b16 %v614
        %v867 = vunpack.c.l.b16 %v615
        %v868 = vunpack.c.l.b16 %v616
        %v869 = vunpack.c.l.b16 %v617
        %v870 = vunpack.c.l.b16 %v618
        %v871 = vunpack.c.l.b16 %v619
        %v872 = vunpack.c.l.b16 %v620
        %v873 = vunpack.c.l.b16 %v621
        %v874 = vunpack.c.l.b16 %v622
        %v875 = vunpack.c.l.b16 %v623
        %v876 = vunpack.c.l.b16 %v624
        %v877 = vunpack.c.l.b16 %v625
        %v878 = vunpack.c.l.b16 %v626
        %v879 = vunpack.c.l.b16 %v627
        %v880 = vunpack.c.l.b16 %v628
        %v881 = vunpack.c.l.b16 %v629
        %v882 = vunpack.c.l.b16 %v630
        %v883 = vunpack.c.l.b16 %v631
        %v884 = vunpack.c.l.b16 %v632
        %v885 = vunpack.c.l.b16 %v633
        %v886 = vunpack.c.l.b16 %v634
        %v887 = vunpack.c.l.b16 %v635
        %v888 = vunpack.c.l.b16 %v636
        %v889 = vunpack.c.l.b16 %v637
        %v890 = vunpack.c.l.b16 %v638
        %v891 = vunpack.c.l.b16 %v639
        %v892 = vunpack.c.l.b16 %v640
        %v893 = vunpack.c.l.b16 %v641
        %v894 = vunpack.c.l.b16 %v642
        %v895 = vunpack.c.l.b16 %v643
        %v896 = vunpack.c.l.b16 %v644
        %v897 = vunpack.c.l.b16 %v645
        %v898 = vunpack.c.l.b16 %v646
        %v899 = vunpack.c.l.b16 %v647
        %v900 = vunpack.c.l.b16 %v648
        %v901 = vunpack.c.l.b16 %v649
        %v902 = vunpack.c.l.b16 %v650
        %v903 = vunpack.c.l.b16 %v651
        %v904 = vunpack.c.l.b16 %v652
        %v905 = vunpack.c.l.b16 %v653
        %v906 = vunpack.c.l.b16 %v654
        %v907 = vunpack.c.l.b16 %v655
        %v908 = vunpack.c.l.b16 %v656
        %v909 = vunpack.c.l.b16 %v657
        %v910 = vunpack.c.l.b16 %v658
        %v911 = vunpack.c.l.b16 %v659
        %v912 = vunpack.c.l.b16 %v660
        %v913 = vunpack.c.l.b16 %v661
        %v914 = vunpack.c.l.b16 %v662
        %v915 = vunpack.c.l.b16 %v663
        %v916 = vunpack.c.l.b16 %v664
        %v917 = vunpack.c.l.b16 %v665
        %v918 = vunpack.c.l.b16 %v666
        %v919 = vunpack.c.l.b16 %v667
        %v920 = vunpack.c.l.b16 %v668
        %v921 = vunpack.c.l.b16 %v669
        %v922 = vunpack.c.l.b16 %v670
        %v923 = vunpack.c.l.b16 %v671
        %v924 = vunpack.c.l.b16 %v672
        %v925 = vunpack.c.l.b16 %v673
        %v926 = vunpack.c.l.b16 %v674
        %v927 = vunpack.c.l.b16 %v675
        %v928 = vunpack.c.l.b16 %v676
        %v929 = vunpack.c.l.b16 %v677
        %v930 = vunpack.c.l.b16 %v678
        %v931 = vunpack.c.l.b16 %v679
        %v932 = vunpack.c.l.b16 %v680
        %v933 = vunpack.c.l.b16 %v681
        %v934 = vunpack.c.l.b16 %v682
        %v935 = vunpack.c.l.b16 %v683
        %v936 = vunpack.c.l.b16 %v684
        %v937 = vunpack.c.l.b16 %v685
        %v938 = vpack.c.b16 %v843, %v842
        %v939 = vpack.c.b16 %v845, %v844
        %v940 = vpack.c.b16 %v847, %v846
        %v941 = vpack.c.b16 %v849, %v848
        %v942 = vpack.c.b16 %v851, %v850
        %v943 = vpack.c.b16 %v853, %v852
        %v944 = vpack.c.b16 %v855, %v854
        %v945 = vpack.c.b16 %v857, %v856
        %v946 = vpack.c.b16 %v859, %v858
        %v947 = vpack.c.b16 %v861, %v860
        %v948 = vpack.c.b16 %v863, %v862
        %v949 = vpack.c.b16 %v865, %v864
        %v950 = vpack.c.b16 %v867, %v866
        %v951 = vpack.c.b16 %v869, %v868
        %v952 = vpack.c.b16 %v871, %v870
        %v953 = vpack.c.b16 %v873, %v872
        %v954 = vpack.c.b16 %v875, %v874
        %v955 = vpack.c.b16 %v877, %v876
        %v956 = vpack.c.b16 %v879, %v878
        %v957 = vpack.c.b16 %v881, %v880
        %v958 = vpack.c.b16 %v883, %v882
        %v959 = vpack.c.b16 %v885, %v884
        %v960 = vpack.c.b16 %v887, %v886
        %v961 = vpack.c.b16 %v889, %v888
        %v962 = vpack.c.b16 %v891, %v890
        %v963 = vpack.c.b16 %v893, %v892
        %v964 = vpack.c.b16 %v895, %v894
        %v965 = vpack.c.b16 %v897, %v896
        %v966 = vpack.c.b16 %v899, %v898
        %v967 = vpack.c.b16 %v901, %v900
        %v968 = vpack.c.b16 %v903, %v902
        %v969 = vpack.c.b16 %v905, %v904
        %v970 = vpack.c.b16 %v907, %v906
        %v971 = vpack.c.b16 %v909, %v908
        %v972 = vpack.c.b16 %v911, %v910
        %v973 = vpack.c.b16 %v913, %v912
        %v974 = vpack.c.b16 %v915, %v914
        %v975 = vpack.c.b16 %v917, %v916
        %v976 = vpack.c.b16 %v919, %v918
        %v977 = vpack.c.b16 %v921, %v920
        %v978 = vpack.c.b16 %v923, %v922
        %v979 = vpack.c.b16 %v925, %v924
        %v980 = vpack.c.b16 %v927, %v926
        %v981 = vpack.c.b16 %v929, %v928
        %v982 = vpack.c.b16 %v931, %v930
        %v983 = vpack.c.b16 %v933, %v932
        %v984 = vpack.c.b16 %v935, %v934
        %v985 = vpack.c.b16 %v937, %v936
        %1034 = vmatprep.subr.bf16.mxu0 0
        %1035 = vmatpush1.bf16.msra.mxu0 %v938
        %1036 = vmatprep.subr.bf16.mxu0 0
        %1037 = vmatpush1.bf16.msra.mxu0 %v939
        %1038 = vmatprep.subr.bf16.mxu0 0
        %1039 = vmatpush1.bf16.msra.mxu0 %v940
        %1040 = vmatprep.subr.bf16.mxu0 0
        %1041 = vmatpush1.bf16.msra.mxu0 %v941
        %1042 = vmatprep.subr.bf16.mxu0 0
        %1043 = vmatpush1.bf16.msra.mxu0 %v942
        %1044 = vmatprep.subr.bf16.mxu0 0
        %1045 = vmatpush1.bf16.msra.mxu0 %v943
        %1046 = vmatprep.subr.bf16.mxu0 0
        %1047 = vmatpush1.bf16.msra.mxu0 %v944
        %1048 = vmatprep.subr.bf16.mxu0 0
        %1049 = vmatpush1.bf16.msra.mxu0 %v945
        %1050 = vmatprep.subr.bf16.mxu0 0
        %1051 = vmatpush1.bf16.msra.mxu0 %v946
        %1052 = vmatprep.subr.bf16.mxu0 0
        %1053 = vmatpush1.bf16.msra.mxu0 %v947
        %1054 = vmatprep.subr.bf16.mxu0 0
        %1055 = vmatpush1.bf16.msra.mxu0 %v948
        %1056 = vmatprep.subr.bf16.mxu0 0
        %1057 = vmatpush1.bf16.msra.mxu0 %v949
        %1058 = vmatprep.subr.bf16.mxu0 0
        %1059 = vmatpush1.bf16.msra.mxu0 %v950
        %1060 = vmatprep.subr.bf16.mxu0 0
        %1061 = vmatpush1.bf16.msra.mxu0 %v951
        %1062 = vmatprep.subr.bf16.mxu0 0
        %1063 = vmatpush1.bf16.msra.mxu0 %v952
        %1064 = vmatprep.subr.bf16.mxu0 0
        %1065 = vmatpush1.bf16.msra.mxu0 %v953
        %1066 = vmatprep.mubr.bf16.mxu0 %v723
        %1067 = vmatmul.mubr.bf16.gmra.mrb[0].mxu0 %v722
        %v1068 = vpop.f32.mrb[0].mxu0
        %v1069 = vadd.f32 0.0, %v1068
        %v1070 = vpop.f32.mrb[0].mxu0
        %v1071 = vpop.f32.mrb[0].mxu0
        %v1072 = vadd.f32 0.0, %v1071
        %v1073 = vpop.f32.mrb[0].mxu0
        %1074 = vmatprep.mubr.bf16.mxu0 %v729
        %1075 = vmatmul.mubr.bf16.gmra.mrb[0].mxu0 %v728
        %v1076 = vpop.f32.mrb[0].mxu0
        %v1077 = vadd.f32 0.0, %v1076
        %v1078 = vpop.f32.mrb[0].mxu0
        %v1079 = vpop.f32.mrb[0].mxu0
        %v1080 = vadd.f32 0.0, %v1079
        %v1081 = vpop.f32.mrb[0].mxu0
        %1082 = vdwg.mxu0
        %1083 = vmatprep.subr.bf16.mxu0 0
        %1084 = vmatpush1.bf16.msra.mxu0 %v954
        %1085 = vmatprep.subr.bf16.mxu0 0
        %1086 = vmatpush1.bf16.msra.mxu0 %v955
        %1087 = vmatprep.subr.bf16.mxu0 0
        %1088 = vmatpush1.bf16.msra.mxu0 %v956
        %1089 = vmatprep.subr.bf16.mxu0 0
        %1090 = vmatpush1.bf16.msra.mxu0 %v957
        %1091 = vmatprep.subr.bf16.mxu0 0
        %1092 = vmatpush1.bf16.msra.mxu0 %v958
        %1093 = vmatprep.subr.bf16.mxu0 0
        %1094 = vmatpush1.bf16.msra.mxu0 %v959
        %1095 = vmatprep.subr.bf16.mxu0 0
        %1096 = vmatpush1.bf16.msra.mxu0 %v960
        %1097 = vmatprep.subr.bf16.mxu0 0
        %1098 = vmatpush1.bf16.msra.mxu0 %v961
        %1099 = vmatprep.subr.bf16.mxu0 0
        %1100 = vmatpush1.bf16.msra.mxu0 %v962
        %1101 = vmatprep.subr.bf16.mxu0 0
        %1102 = vmatpush1.bf16.msra.mxu0 %v963
        %1103 = vmatprep.subr.bf16.mxu0 0
        %1104 = vmatpush1.bf16.msra.mxu0 %v964
        %1105 = vmatprep.subr.bf16.mxu0 0
        %1106 = vmatpush1.bf16.msra.mxu0 %v965
        %1107 = vmatprep.subr.bf16.mxu0 0
        %1108 = vmatpush1.bf16.msra.mxu0 %v966
        %1109 = vmatprep.subr.bf16.mxu0 0
        %1110 = vmatpush1.bf16.msra.mxu0 %v967
        %1111 = vmatprep.subr.bf16.mxu0 0
        %1112 = vmatpush1.bf16.msra.mxu0 %v968
        %1113 = vmatprep.subr.bf16.mxu0 0
        %1114 = vmatpush1.bf16.msra.mxu0 %v969
        %1115 = vmatprep.mubr.bf16.mxu0 %v725
        %1116 = vmatmul.mubr.bf16.gmra.mrb[0].mxu0 %v724
        %v1117 = vpop.f32.mrb[0].mxu0
        %v1118 = vadd.f32 %v1069, %v1117
        %v1119 = vpop.f32.mrb[0].mxu0
        %v1120 = vpop.f32.mrb[0].mxu0
        %v1121 = vadd.f32 %v1072, %v1120
        %v1122 = vpop.f32.mrb[0].mxu0
        %1123 = vmatprep.mubr.bf16.mxu0 %v731
        %1124 = vmatmul.mubr.bf16.gmra.mrb[0].mxu0 %v730
        %v1125 = vpop.f32.mrb[0].mxu0
        %v1126 = vadd.f32 %v1077, %v1125
        %v1127 = vpop.f32.mrb[0].mxu0
        %v1128 = vpop.f32.mrb[0].mxu0
        %v1129 = vadd.f32 %v1080, %v1128
        %v1130 = vpop.f32.mrb[0].mxu0
        %1131 = vdwg.mxu0
        %1132 = vmatprep.subr.bf16.mxu0 0
        %1133 = vmatpush1.bf16.msra.mxu0 %v970
        %1134 = vmatprep.subr.bf16.mxu0 0
        %1135 = vmatpush1.bf16.msra.mxu0 %v971
        %1136 = vmatprep.subr.bf16.mxu0 0
        %1137 = vmatpush1.bf16.msra.mxu0 %v972
        %1138 = vmatprep.subr.bf16.mxu0 0
        %1139 = vmatpush1.bf16.msra.mxu0 %v973
        %1140 = vmatprep.subr.bf16.mxu0 0
        %1141 = vmatpush1.bf16.msra.mxu0 %v974
        %1142 = vmatprep.subr.bf16.mxu0 0
        %1143 = vmatpush1.bf16.msra.mxu0 %v975
        %1144 = vmatprep.subr.bf16.mxu0 0
        %1145 = vmatpush1.bf16.msra.mxu0 %v976
        %1146 = vmatprep.subr.bf16.mxu0 0
        %1147 = vmatpush1.bf16.msra.mxu0 %v977
        %1148 = vmatprep.subr.bf16.mxu0 0
        %1149 = vmatpush1.bf16.msra.mxu0 %v978
        %1150 = vmatprep.subr.bf16.mxu0 0
        %1151 = vmatpush1.bf16.msra.mxu0 %v979
        %1152 = vmatprep.subr.bf16.mxu0 0
        %1153 = vmatpush1.bf16.msra.mxu0 %v980
        %1154 = vmatprep.subr.bf16.mxu0 0
        %1155 = vmatpush1.bf16.msra.mxu0 %v981
        %1156 = vmatprep.subr.bf16.mxu0 0
        %1157 = vmatpush1.bf16.msra.mxu0 %v982
        %1158 = vmatprep.subr.bf16.mxu0 0
        %1159 = vmatpush1.bf16.msra.mxu0 %v983
        %1160 = vmatprep.subr.bf16.mxu0 0
        %1161 = vmatpush1.bf16.msra.mxu0 %v984
        %1162 = vmatprep.subr.bf16.mxu0 0
        %1163 = vmatpush1.bf16.msra.mxu0 %v985
        %1164 = vmatprep.mubr.bf16.mxu0 %v727
        %1165 = vmatmul.mubr.bf16.gmra.mrb[0].mxu0 %v726
        %v1166 = vpop.f32.mrb[0].mxu0
        %v1167 = vadd.f32 %v1118, %v1166
        %v1168 = vpop.f32.mrb[0].mxu0
        %v1169 = vpop.f32.mrb[0].mxu0
        %v1170 = vadd.f32 %v1121, %v1169
        %v1171 = vpop.f32.mrb[0].mxu0
        %1172 = vmatprep.mubr.bf16.mxu0 %v733
        %1173 = vmatmul.mubr.bf16.gmra.mrb[0].mxu0 %v732
        %v1174 = vpop.f32.mrb[0].mxu0
        %v1175 = vadd.f32 %v1126, %v1174
        %v1176 = vpop.f32.mrb[0].mxu0
        %v1177 = vpop.f32.mrb[0].mxu0
        %v1178 = vadd.f32 %v1129, %v1177
        %v1179 = vpop.f32.mrb[0].mxu0
        %1180 = vdwg.mxu0
        %v1181 = vadd.f32 %v586, %v1167
        %v1182 = vadd.f32 %v587, %v1170
        %v1183 = vadd.f32 %v588, %v1175
        %v1184 = vadd.f32 %v589, %v1178
        %1185 = vst [vmem:[#allocation2] sm:$0xff] %v1181
        %1186 = vst [vmem:[#allocation2 + $0x8] sm:$0xff] %v1182
        %1187 = vst [vmem:[#allocation2 + $0x10] sm:$0xff] %v1183
        %1188 = vst [vmem:[#allocation2 + $0x18] sm:$0xff] %v1184
        %p1189 = scmp.eq.s32.totalorder %s28, 1
        // Predicated region
        $region96: #{vae_forward.2} parent=66 // pred_check
          %p1190 = pneg %p1189
        $region97: #{vae_forward.2} parent=66 // pred_check_branch
          %1192 = sbr.rel (%p1190) target = $region99
        $region98: #{vae_forward.2} parent=66 // pred_region
          %v1193 = vld [vmem:[#allocation3] sm:$0xff]
          %v1194 = vld [vmem:[#allocation3 + $0x8] sm:$0xff]
          %v1195 = vld [vmem:[#allocation3 + $0x10] sm:$0xff]
          %v1196 = vld [vmem:[#allocation3 + $0x18] sm:$0xff]
          %v1197 = vmax.f32 %v1193, 1e-24
          %v1198 = vmax.f32 %v1194, 1e-24
          %v1199 = vmax.f32 %v1195, 1e-24
          %v1200 = vmax.f32 %v1196, 1e-24
          %v1201 = vrsqrt.pop %v1197
          %v1202 = vrsqrt.pop %v1198
          %v1203 = vrsqrt.pop %v1199
          %v1204 = vrsqrt.pop %v1200
          %v1205 = vld [vmem:[#allocation2] sm:$0xff]
          %v1206 = vld [vmem:[#allocation2 + $0x8] sm:$0xff]
          %v1207 = vld [vmem:[#allocation2 + $0x10] sm:$0xff]
          %v1208 = vld [vmem:[#allocation2 + $0x18] sm:$0xff]
          %1210 = vset.pattern.permute.xlu0 0
          %1211 = vperm.xlu0 %1210, %v1201
          %v1212 = vpop.permute.xlu0 %1211
          %1215 = vset.pattern.permute.xlu0 0
          %1216 = vperm.xlu0 %1215, %v1202
          %v1217 = vpop.permute.xlu0 %1216
          %1220 = vset.pattern.permute.xlu0 0
          %1221 = vperm.xlu0 %1220, %v1203
          %v1222 = vpop.permute.xlu0 %1221
          %1225 = vset.pattern.permute.xlu0 0
          %1226 = vperm.xlu0 %1225, %v1204
          %v1227 = vpop.permute.xlu0 %1226
          %v1229 = vmul.f32 %v1205, %v1212
          %v1230 = vmul.f32 %v1206, %v1217
          %v1231 = vmul.f32 %v1207, %v1222
          %v1232 = vmul.f32 %v1208, %v1227
          %v1233 = vld [vmem:[#allocation5] sm:$0x1]
          %v1235 = vlaneseq
          %v1236 = vshrl.u32 %v1235, 7
          %v1237 = vsub.s32 0, %v1236
          %v1238 = vrot.slane %v1233, %v1237
          %v1240 = vadd.f32 %v1229, %v1238
          %v1241 = vadd.f32 %v1230, %v1238
          %v1242 = vadd.f32 %v1231, %v1238
          %v1243 = vadd.f32 %v1232, %v1238
          %v1244 = vtanh.pop %v1240
          %v1245 = vtanh.pop %v1241
          %v1246 = vtanh.pop %v1242
          %v1247 = vtanh.pop %v1243
          %v1248 = vpack.c.bf16 %v1245, %v1244
          %v1249 = vpack.c.bf16 %v1247, %v1246
          %v1250 = vld [vmem:[#allocation7] sm:$0xf]
          %v1251 = vld [vmem:[#allocation7 + $0x4] sm:$0xf]
          %v1252 = vld [vmem:[#allocation7 + $0x8] sm:$0xf]
          %v1253 = vld [vmem:[#allocation7 + $0xc] sm:$0xf]
          %v1254 = vld [vmem:[#allocation7 + $0x10] sm:$0xf]
          %v1255 = vld [vmem:[#allocation7 + $0x14] sm:$0xf]
          %v1256 = vld [vmem:[#allocation7 + $0x18] sm:$0xf]
          %v1257 = vld [vmem:[#allocation7 + $0x1c] sm:$0xf]
          %v1258 = vld [vmem:[#allocation7 + $0x20] sm:$0xf]
          %v1259 = vld [vmem:[#allocation7 + $0x24] sm:$0xf]
          %v1260 = vld [vmem:[#allocation7 + $0x28] sm:$0xf]
          %v1261 = vld [vmem:[#allocation7 + $0x2c] sm:$0xf]
          %v1262 = vld [vmem:[#allocation7 + $0x30] sm:$0xf]
          %v1263 = vld [vmem:[#allocation7 + $0x34] sm:$0xf]
          %v1264 = vld [vmem:[#allocation7 + $0x38] sm:$0xf]
          %v1265 = vld [vmem:[#allocation7 + $0x3c] sm:$0xf]
          %v1266 = vld [vmem:[#allocation9] sm:$0x1]
          %v1268 = vlaneseq
          %v1269 = vshrl.u32 %v1268, 7
          %v1270 = vsub.s32 0, %v1269
          %v1271 = vrot.slane %v1266, %v1270
          %v1289 = vunpack.c.l.b16 %v1250
          %v1290 = vunpack.c.l.b16 %v1251
          %v1291 = vunpack.c.l.b16 %v1252
          %v1292 = vunpack.c.l.b16 %v1253
          %v1293 = vunpack.c.l.b16 %v1254
          %v1294 = vunpack.c.l.b16 %v1255
          %v1295 = vunpack.c.l.b16 %v1256
          %v1296 = vunpack.c.l.b16 %v1257
          %v1297 = vunpack.c.l.b16 %v1258
          %v1298 = vunpack.c.l.b16 %v1259
          %v1299 = vunpack.c.l.b16 %v1260
          %v1300 = vunpack.c.l.b16 %v1261
          %v1301 = vunpack.c.l.b16 %v1262
          %v1302 = vunpack.c.l.b16 %v1263
          %v1303 = vunpack.c.l.b16 %v1264
          %v1304 = vunpack.c.l.b16 %v1265
          %v1305 = vpack.c.b16 %v1290, %v1289
          %v1306 = vpack.c.b16 %v1292, %v1291
          %v1307 = vpack.c.b16 %v1294, %v1293
          %v1308 = vpack.c.b16 %v1296, %v1295
          %v1309 = vpack.c.b16 %v1298, %v1297
          %v1310 = vpack.c.b16 %v1300, %v1299
          %v1311 = vpack.c.b16 %v1302, %v1301
          %v1312 = vpack.c.b16 %v1304, %v1303
          %1321 = vmatprep.subr.bf16.mxu0 0
          %1322 = vmatpush1.bf16.msra.mxu0 %v1305
          %1323 = vmatprep.subr.bf16.mxu0 0
          %1324 = vmatpush1.bf16.msra.mxu0 %v1306
          %1325 = vmatprep.subr.bf16.mxu0 0
          %1326 = vmatpush1.bf16.msra.mxu0 %v1307
          %1327 = vmatprep.subr.bf16.mxu0 0
          %1328 = vmatpush1.bf16.msra.mxu0 %v1308
          %1329 = vmatprep.subr.bf16.mxu0 0
          %1330 = vmatpush1.bf16.msra.mxu0 %v1309
          %1331 = vmatprep.subr.bf16.mxu0 0
          %1332 = vmatpush1.bf16.msra.mxu0 %v1310
          %1333 = vmatprep.subr.bf16.mxu0 0
          %1334 = vmatpush1.bf16.msra.mxu0 %v1311
          %1335 = vmatprep.subr.bf16.mxu0 0
          %1336 = vmatpush1.bf16.msra.mxu0 %v1312
          %1337 = vmatprep.subr.bf16.mxu0 0
          %1338 = vmatpush1.bf16.msra.mxu0 0
          %1339 = vmatprep.subr.bf16.mxu0 0
          %1340 = vmatpush1.bf16.msra.mxu0 0
          %1341 = vmatprep.subr.bf16.mxu0 0
          %1342 = vmatpush1.bf16.msra.mxu0 0
          %1343 = vmatprep.subr.bf16.mxu0 0
          %1344 = vmatpush1.bf16.msra.mxu0 0
          %1345 = vmatprep.subr.bf16.mxu0 0
          %1346 = vmatpush1.bf16.msra.mxu0 0
          %1347 = vmatprep.subr.bf16.mxu0 0
          %1348 = vmatpush1.bf16.msra.mxu0 0
          %1349 = vmatprep.subr.bf16.mxu0 0
          %1350 = vmatpush1.bf16.msra.mxu0 0
          %1351 = vmatprep.subr.bf16.mxu0 0
          %1352 = vmatpush1.bf16.msra.mxu0 0
          %1353 = vmatprep.mubr.bf16.mxu0 0
          %1354 = vmatmul.mubr.bf16.gmra.mrb[0].mxu0 %v1248
          %v1355 = vpop.f32.mrb[0].mxu0
          %v1356 = vadd.f32 %v1271, %v1355
          %v1357 = vpop.f32.mrb[0].mxu0
          %v1358 = vpop.f32.mrb[0].mxu0
          %v1359 = vadd.f32 %v1271, %v1358
          %v1360 = vpop.f32.mrb[0].mxu0
          %1361 = vmatprep.mubr.bf16.mxu0 0
          %1362 = vmatmul.mubr.bf16.gmra.mrb[0].mxu0 %v1249
          %v1363 = vpop.f32.mrb[0].mxu0
          %v1364 = vadd.f32 %v1271, %v1363
          %v1365 = vpop.f32.mrb[0].mxu0
          %v1366 = vpop.f32.mrb[0].mxu0
          %v1367 = vadd.f32 %v1271, %v1366
          %v1368 = vpop.f32.mrb[0].mxu0
          %1369 = vdwg.mxu0
          %1370 = vst [vmem:[%s463] sm:$0xff] %v1356
          %1371 = vst [vmem:[%s463 + $0x8] sm:$0xff] %v1359
          %1372 = vst [vmem:[%s463 + $0x10] sm:$0xff] %v1364
          %1373 = vst [vmem:[%s463 + $0x18] sm:$0xff] %v1367
          %v1374 = vpack.c.bf16 %v1359, %v1356
          %v1375 = vpack.c.bf16 %v1367, %v1364
          %v1376 = vld [vmem:[#allocation10] sm:$0xf]
          %v1377 = vld [vmem:[#allocation10 + $0x4] sm:$0xf]
          %v1378 = vld [vmem:[#allocation10 + $0x8] sm:$0xf]
          %v1379 = vld [vmem:[#allocation10 + $0xc] sm:$0xf]
          %v1380 = vld [vmem:[#allocation10 + $0x10] sm:$0xf]
          %v1381 = vld [vmem:[#allocation10 + $0x14] sm:$0xf]
          %v1382 = vld [vmem:[#allocation10 + $0x18] sm:$0xf]
          %v1383 = vld [vmem:[#allocation10 + $0x1c] sm:$0xf]
          %v1384 = vld [vmem:[#allocation10 + $0x20] sm:$0xf]
          %v1385 = vld [vmem:[#allocation10 + $0x24] sm:$0xf]
          %v1386 = vld [vmem:[#allocation10 + $0x28] sm:$0xf]
          %v1387 = vld [vmem:[#allocation10 + $0x2c] sm:$0xf]
          %v1388 = vld [vmem:[#allocation10 + $0x30] sm:$0xf]
          %v1389 = vld [vmem:[#allocation10 + $0x34] sm:$0xf]
          %v1390 = vld [vmem:[#allocation10 + $0x38] sm:$0xf]
          %v1391 = vld [vmem:[#allocation10 + $0x3c] sm:$0xf]
          %v1392 = vld [vmem:[#allocation12] sm:$0x1]
          %v1394 = vlaneseq
          %v1395 = vshrl.u32 %v1394, 7
          %v1396 = vsub.s32 0, %v1395
          %v1397 = vrot.slane %v1392, %v1396
          %v1415 = vunpack.c.l.b16 %v1376
          %v1416 = vunpack.c.l.b16 %v1377
          %v1417 = vunpack.c.l.b16 %v1378
          %v1418 = vunpack.c.l.b16 %v1379
          %v1419 = vunpack.c.l.b16 %v1380
          %v1420 = vunpack.c.l.b16 %v1381
          %v1421 = vunpack.c.l.b16 %v1382
          %v1422 = vunpack.c.l.b16 %v1383
          %v1423 = vunpack.c.l.b16 %v1384
          %v1424 = vunpack.c.l.b16 %v1385
          %v1425 = vunpack.c.l.b16 %v1386
          %v1426 = vunpack.c.l.b16 %v1387
          %v1427 = vunpack.c.l.b16 %v1388
          %v1428 = vunpack.c.l.b16 %v1389
          %v1429 = vunpack.c.l.b16 %v1390
          %v1430 = vunpack.c.l.b16 %v1391
          %v1431 = vpack.c.b16 %v1416, %v1415
          %v1432 = vpack.c.b16 %v1418, %v1417
          %v1433 = vpack.c.b16 %v1420, %v1419
          %v1434 = vpack.c.b16 %v1422, %v1421
          %v1435 = vpack.c.b16 %v1424, %v1423
          %v1436 = vpack.c.b16 %v1426, %v1425
          %v1437 = vpack.c.b16 %v1428, %v1427
          %v1438 = vpack.c.b16 %v1430, %v1429
          %1447 = vmatprep.subr.bf16.mxu0 0
          %1448 = vmatpush1.bf16.msra.mxu0 %v1431
          %1449 = vmatprep.subr.bf16.mxu0 0
          %1450 = vmatpush1.bf16.msra.mxu0 %v1432
          %1451 = vmatprep.subr.bf16.mxu0 0
          %1452 = vmatpush1.bf16.msra.mxu0 %v1433
          %1453 = vmatprep.subr.bf16.mxu0 0
          %1454 = vmatpush1.bf16.msra.mxu0 %v1434
          %1455 = vmatprep.subr.bf16.mxu0 0
          %1456 = vmatpush1.bf16.msra.mxu0 %v1435
          %1457 = vmatprep.subr.bf16.mxu0 0
          %1458 = vmatpush1.bf16.msra.mxu0 %v1436
          %1459 = vmatprep.subr.bf16.mxu0 0
          %1460 = vmatpush1.bf16.msra.mxu0 %v1437
          %1461 = vmatprep.subr.bf16.mxu0 0
          %1462 = vmatpush1.bf16.msra.mxu0 %v1438
          %1463 = vmatprep.subr.bf16.mxu0 0
          %1464 = vmatpush1.bf16.msra.mxu0 0
          %1465 = vmatprep.subr.bf16.mxu0 0
          %1466 = vmatpush1.bf16.msra.mxu0 0
          %1467 = vmatprep.subr.bf16.mxu0 0
          %1468 = vmatpush1.bf16.msra.mxu0 0
          %1469 = vmatprep.subr.bf16.mxu0 0
          %1470 = vmatpush1.bf16.msra.mxu0 0
          %1471 = vmatprep.subr.bf16.mxu0 0
          %1472 = vmatpush1.bf16.msra.mxu0 0
          %1473 = vmatprep.subr.bf16.mxu0 0
          %1474 = vmatpush1.bf16.msra.mxu0 0
          %1475 = vmatprep.subr.bf16.mxu0 0
          %1476 = vmatpush1.bf16.msra.mxu0 0
          %1477 = vmatprep.subr.bf16.mxu0 0
          %1478 = vmatpush1.bf16.msra.mxu0 0
          %1479 = vmatprep.mubr.bf16.mxu0 0
          %1480 = vmatmul.mubr.bf16.gmra.mrb[0].mxu0 %v1374
          %v1481 = vpop.f32.mrb[0].mxu0
          %v1482 = vadd.f32 %v1397, %v1481
          %v1483 = vpop.f32.mrb[0].mxu0
          %v1484 = vpop.f32.mrb[0].mxu0
          %v1485 = vadd.f32 %v1397, %v1484
          %v1486 = vpop.f32.mrb[0].mxu0
          %1487 = vmatprep.mubr.bf16.mxu0 0
          %1488 = vmatmul.mubr.bf16.gmra.mrb[0].mxu0 %v1375
          %v1489 = vpop.f32.mrb[0].mxu0
          %v1490 = vadd.f32 %v1397, %v1489
          %v1491 = vpop.f32.mrb[0].mxu0
          %v1492 = vpop.f32.mrb[0].mxu0
          %v1493 = vadd.f32 %v1397, %v1492
          %v1494 = vpop.f32.mrb[0].mxu0
          %1495 = vdwg.mxu0
          %v1496 = vtanh.pop %v1482
          %v1497 = vtanh.pop %v1485
          %v1498 = vtanh.pop %v1490
          %v1499 = vtanh.pop %v1493
          %v1500 = vpack.c.bf16 %v1497, %v1496
          %v1501 = vpack.c.bf16 %v1499, %v1498
          %v1504 = vunpack.c.l.b16 %v1500
          %v1505 = vunpack.c.h.b16 %v1500
          %v1506 = vunpack.c.l.b16 %v1501
          %v1507 = vunpack.c.h.b16 %v1501
          %v1508 = vpack.c.b16 %v1504, %v1504
          %v1509 = vpack.c.b16 %v1505, %v1505
          %v1510 = vpack.c.b16 %v1506, %v1506
          %v1511 = vpack.c.b16 %v1507, %v1507
          %1516 = vst [vmem:[%s469] sm:$0xf] %v1508
          %1517 = vst [vmem:[%s469 + $0x4] sm:$0xf] %v1509
          %1518 = vst [vmem:[%s469 + $0x8] sm:$0xf] %v1510
          %1519 = vst [vmem:[%s469 + $0xc] sm:$0xf] %v1511
        $region99: #{vae_forward.2} parent=66 // pred_fallthru
          _
        %s1520 = smul.u32 4, %s27
        %p1521 = scmp.lt.s32.totalorder %s1520, 3
        %s1522 = scalar_select %p1521, %s1520, 3
        %s1523 = smul.addr %s1522, 8
        %s1524 = scalar_lea.vmem %s7, %s1523
        %s1525 = smul.u32 4, %s27
        %p1526 = scmp.lt.s32.totalorder %s1525, 3
        %s1527 = scalar_select %p1526, %s1525, 3
        %s1528 = smul.addr %s1527, 4
        %s1529 = scalar_lea.vmem %s8, %s1528
        // Predicated region
        $region100: #{vae_forward.2} parent=66 // pred_check
          %p1530 = pneg %p212
        $region101: #{vae_forward.2} parent=66 // pred_check_branch
          %1532 = sbr.rel (%p1530) target = $region103
        $region102: #{vae_forward.2} parent=66 // pred_region
          %s1533 = smul.u32 4, %s27
        $region103: #{vae_forward.2} parent=66 // pred_fallthru
          _
        // Predicated region
        $region104: #{vae_forward.2} parent=66 // pred_check
          %p1534 = pneg %p238
        $region105: #{vae_forward.2} parent=66 // pred_check_branch
          %1536 = sbr.rel (%p1534) target = $region107
        $region106: #{vae_forward.2} parent=66 // pred_region
          %s1537 = smul.u32 4, %s27
        $region107: #{vae_forward.2} parent=66 // pred_fallthru
          _
        // Predicated region
        $region108: #{vae_forward.2} parent=66 // pred_check
          %p1538 = pneg %p212
        $region109: #{vae_forward.2} parent=66 // pred_check_branch
          %1540 = sbr.rel (%p1538) target = $region111
        $region110: #{vae_forward.2} parent=66 // pred_region
          %s1541 = smul.u32 4, %s27
          %p1542 = scmp.lt.s32.totalorder %s1541, 3
          %s1543 = scalar_select %p1542, %s1541, 3
          %s1544 = smul.addr %s1543, 8
          %s1545 = scalar_lea.vmem %s7, %s1544
        $region111: #{vae_forward.2} parent=66 // pred_fallthru
          _
        // Predicated region
        $region112: #{vae_forward.2} parent=66 // pred_check
          %p1546 = pneg %p238
        $region113: #{vae_forward.2} parent=66 // pred_check_branch
          %1548 = sbr.rel (%p1546) target = $region115
        $region114: #{vae_forward.2} parent=66 // pred_region
          %s1549 = smul.u32 4, %s27
          %p1550 = scmp.lt.s32.totalorder %s1549, 3
          %s1551 = scalar_select %p1550, %s1549, 3
          %s1552 = smul.addr %s1551, 4
          %s1553 = scalar_lea.vmem %s8, %s1552
        $region115: #{vae_forward.2} parent=66 // pred_fallthru
          _
      $region67: #{vae_forward.2} parent=5 // pred_fallthru
        _
      %p1554 = scmp.le.s32.totalorder 2, %s18
      // Predicated region
      $region116: #{vae_forward.2} parent=5 // pred_check
        %p1555 = pneg %p1554
      $region117: #{vae_forward.2} parent=5 // pred_check_branch
        %1557 = sbr.rel (%p1555) target = $region119
      $region118: #{vae_forward.2} parent=5 // pred_region
        %s1558 = ssub.s32 %s18, 2
      $region119: #{vae_forward.2} parent=5 // pred_fallthru
        _
    $region6: #{vae_forward.2} parent=1 // loop_footer
      %s22 = sadd.s32 1, %s18
    $region7: #{vae_forward.2} parent=1 // loop_footer_branch
      %17 = sbr.rel target = $region3
    $region8: #{vae_forward.2} parent=1 // loop_exit
      _
    %1559 = vsyncpa [#allocation6], 1
    %s1560 = scalar_lea.sflag [#allocation6], 1
    %1561 = vsyncpa %s1560, 1
    %1562 = vsyncpa [#allocation8], 1
    %1563 = vsyncpa [#allocation11], 1

</llo_original>
